<compile_context>
chip_gen: v7x
topology: tpu7x:2x2x1
jax: 0.10.0
libtpu: 0.0.40
codegen_flags: <defaults>
</compile_context>

<pallas_src>
import functools

import jax
import jax.numpy as jnp
import numpy as np
from jax.experimental import pallas as pl
from jax.experimental.pallas import tpu as pltpu


def _round_up(v, m):
    return -(-v // m) * m


# Bias-pack row offsets (all multiples of 8 -> aligned f32 sublane slices).
_B_UP, _B_DOWN, _B_CELL = 0, 32, 64


# ----------------------------------------------------------------------------
# Pallas kernel: whole forward pass, single invocation (grid=()), all inputs
# are whole-array VMEM blocks.
# ----------------------------------------------------------------------------
def _ehon_kernel(hx_ref, hxu_ref, hxd_ref, idxu_ref, idxd_ref,
                 wpu_ref, wpd_ref, wc_ref, bias_ref, out_ref,
                 *, N, Fin, Fu, Fd, D, H, Fout, Pu, Pd, R0, OUT_W):
    f32 = jnp.float32
    bf16 = jnp.bfloat16

    hx = hx_ref[...]          # (N,  Fin + D) bf16  = [h | x]
    hxu = hxu_ref[...]        # (Nu, Fu  + D) bf16  = [h_up | x_up]
    hxd = hxd_ref[...]        # (Nd, Fd  + D) bf16  = [h_down | x_down]
    bias = bias_ref[...]      # (80, Wb) f32 bias pack

    def mm(a, b):
        return jnp.dot(a, b, preferred_element_type=f32)

    relu = lambda v: jnp.maximum(v, 0.0)

    def sigmoid(v):
        # exp -> EUP, approx reciprocal -> EUP: keeps the divide off the VALU.
        return pl.reciprocal(1.0 + jnp.exp(-v), approx=True)

    def side(idx_ref, hx2, F2, wp_ref, P, boff):
        # Weight pack (bf16) row layout (P = 16-aligned start of w2):
        #   [0 : Fin+F2+1]      w1 (fused layer-1 weights, [h_i | h_j | x_msg])
        #   [P : P+H]           w2
        #   [P+H : P+2H]        wco1
        #   [P+2H : P+3H, 0:1]  wco2
        wp = wp_ref[...]
        w1 = wp[0:Fin + F2 + 1, :]
        w2 = wp[P:P + H, :]
        wco1 = wp[P + H:P + 2 * H, :]
        wco2 = wp[P + 2 * H:P + 3 * H, 0:1]
        # Bias pack rows (per side): boff+0 / +8 / +16 / +24 = b1/b2/bco1/[bco2,cw]
        b1 = bias[boff + 0:boff + 1, 0:H]
        b2 = bias[boff + 8:boff + 9, 0:H]
        bco1 = bias[boff + 16:boff + 17, 0:H]
        bco2 = bias[boff + 24:boff + 25, 0:1]
        cw_s = bias[boff + 24:boff + 25, 1:2]

        idx = idx_ref[...]                        # (E, 2) = [b_i, b_j] int32
        E = idx.shape[0]
        bi_col = idx[:, 0:1]
        bj_col = idx[:, 1:2]
        # one-hot gather matrices — exact in bf16
        sel_gi = (jax.lax.broadcasted_iota(jnp.int32, (E, N), 1)
                  == bi_col).astype(bf16)         # (E, N)
        sel_gj = (jax.lax.broadcasted_iota(jnp.int32, (E, hx2.shape[0]), 1)
                  == bj_col).astype(bf16)         # (E, N2)

        # fused gather: one MXU push per index vector (features + coords)
        hx_i = mm(sel_gi, hx)                     # (E, Fin + D) f32
        hx_j = mm(sel_gj, hx2)                    # (E, F2  + D) f32
        h_i, x_i = hx_i[:, :Fin], hx_i[:, Fin:]
        h_j, x_j = hx_j[:, :F2], hx_j[:, F2:]
        x_d = x_i - x_j
        x_msg = jnp.sum(jnp.square(x_d), axis=-1, keepdims=True)   # (E, 1)

        # boundary MLP (Linear -> Dropout(identity) -> ReLU -> Linear),
        # layer 1 as ONE matmul over the fused [h_i | h_j | x_msg] input
        msg_in = jnp.concatenate([h_i, h_j, x_msg], axis=-1).astype(bf16)
        z = relu(mm(msg_in, w1) + b1)
        m_in = mm(z.astype(bf16), w2) + b2        # (E, H) per-edge messages

        # coord MLP: Linear -> Dropout(identity) -> ReLU -> Linear -> Sigmoid
        s = relu(mm(m_in.astype(bf16), wco1) + bco1)
        scale = sigmoid(mm(s.astype(bf16), wco2) + bco2)            # (E, 1)

        # fused scatter: payload assembled in registers, segment-summed by
        # contracting the edge dim of the gather matrix (sel_gi^T @ payload)
        payload = jnp.concatenate([m_in, x_d * (scale * cw_s)],
                                  axis=-1).astype(bf16)             # (E, H+D)
        agg = jax.lax.dot_general(sel_gi, payload,
                                  (((0,), (0,)), ((), ())),
                                  preferred_element_type=f32)       # (N, H+D)
        return agg[:, :H], agg[:, H:]

    m_up, x_up_agg = side(idxu_ref, hxu, Fu, wpu_ref, Pu, _B_UP)
    m_down, x_down_agg = side(idxd_ref, hxd, Fd, wpd_ref, Pd, _B_DOWN)

    # Cell-MLP pack (bf16): wc1 rows [0:Fin+2H], wc2 rows [R0:R0+H].
    wc = wc_ref[...]
    wc1 = wc[0:Fin + 2 * H, 0:H]
    wc2 = wc[R0:R0 + H, 0:Fout]
    bc1 = bias[_B_CELL:_B_CELL + 1, 0:H]
    bc2 = bias[_B_CELL + 8:_B_CELL + 9, 0:Fout]

    # cell MLP layer 1 as ONE matmul over the fused [h | m_up | m_down] input
    cell_in = jnp.concatenate(
        [hx[:, :Fin], m_up.astype(bf16), m_down.astype(bf16)], axis=-1)
    zc = relu(mm(cell_in, wc1) + bc1)
    h_out = mm(zc.astype(bf16), wc2) + bc2                          # (N, Fout)

    x_out = hx[:, Fin:].astype(f32) + x_up_agg + x_down_agg         # (N, D)

    # lane-dense fused output slab [h_out | x_out | pad], one unmasked store
    pieces = [h_out, x_out]
    if OUT_W > Fout + D:
        pieces.append(jnp.zeros((N, OUT_W - Fout - D), f32))
    out_ref[...] = jnp.concatenate(pieces, axis=-1)


# ----------------------------------------------------------------------------
# Model setup: pack parameters ONCE, return a jitted per-call forward closure.
# ----------------------------------------------------------------------------
def make_ehon_forward(params):
    f32 = jnp.float32
    bf16 = jnp.bfloat16
    H = params['w2u'].shape[0]
    Fin = params['wc1'].shape[0] - 2 * H
    Fu = params['w1u'].shape[0] - Fin - 1
    Fd = params['w1d'].shape[0] - Fin - 1
    Fout = params['wc2'].shape[1]

    def pack_side_w(w1, w2, wco1, wco2, F2):
        rows1 = Fin + F2 + 1
        P = _round_up(rows1, 16)          # 16-row align for bf16 sublane tiles
        w1p = jnp.zeros((P, H), f32).at[:rows1, :].set(w1.astype(f32))
        wco2p = jnp.zeros((H, H), f32).at[:, 0:1].set(wco2.astype(f32))
        wpack = jnp.concatenate(
            [w1p, w2.astype(f32), wco1.astype(f32), wco2p], axis=0)
        return wpack.astype(bf16), P

    wp_u, Pu = pack_side_w(params['w1u'], params['w2u'],
                           params['wcu1'], params['wcu2'], Fu)
    wp_d, Pd = pack_side_w(params['w1d'], params['w2d'],
                           params['wcd1'], params['wcd2'], Fd)

    Wc = max(H, Fout)
    R0 = _round_up(Fin + 2 * H, 16)
    wc_pack = jnp.zeros((R0 + H, Wc), f32)
    wc_pack = wc_pack.at[:Fin + 2 * H, :H].set(params['wc1'].astype(f32))
    wc_pack = wc_pack.at[R0:R0 + H, :Fout].set(params['wc2'].astype(f32))
    wc_pack = wc_pack.astype(bf16)

    # One f32 bias pack for both sides + cell MLP (rows at multiples of 8).
    Wb = max(H, Fout, 2)
    bias_pack = jnp.zeros((80, Wb), f32)

    def set_row(bp, row, vec):
        vec = jnp.asarray(vec, f32).reshape(-1)
        return bp.at[row, :vec.shape[0]].set(vec)

    cw = params['cw'].astype(f32)
    bias_pack = set_row(bias_pack, _B_UP + 0, params['b1u'])
    bias_pack = set_row(bias_pack, _B_UP + 8, params['b2u'])
    bias_pack = set_row(bias_pack, _B_UP + 16, params['bcu1'])
    bias_pack = bias_pack.at[_B_UP + 24, 0].set(params['bcu2'].astype(f32)[0])
    bias_pack = bias_pack.at[_B_UP + 24, 1].set(cw[0])
    bias_pack = set_row(bias_pack, _B_DOWN + 0, params['b1d'])
    bias_pack = set_row(bias_pack, _B_DOWN + 8, params['b2d'])
    bias_pack = set_row(bias_pack, _B_DOWN + 16, params['bcd1'])
    bias_pack = bias_pack.at[_B_DOWN + 24, 0].set(params['bcd2'].astype(f32)[0])
    bias_pack = bias_pack.at[_B_DOWN + 24, 1].set(cw[1])
    bias_pack = set_row(bias_pack, _B_CELL + 0, params['bc1'])
    bias_pack = set_row(bias_pack, _B_CELL + 8, params['bc2'])

    @jax.jit
    def forward(h, h_up, h_down, x, x_up, x_down, b_up, b_down):
        N, D = h.shape[0], x.shape[1]
        b_up_i, b_up_j = b_up
        b_down_j, b_down_i = b_down   # module's forward unpacks b_down as (j, i)

        # fused [features | coords] inputs -> one gather matmul per index vec
        hx = jnp.concatenate([h, x], axis=-1).astype(bf16)
        hxu = jnp.concatenate([h_up, x_up], axis=-1).astype(bf16)
        hxd = jnp.concatenate([h_down, x_down], axis=-1).astype(bf16)
        idx_u = jnp.stack([b_up_i, b_up_j], axis=-1).astype(jnp.int32)
        idx_d = jnp.stack([b_down_i, b_down_j], axis=-1).astype(jnp.int32)

        OUT_W = _round_up(Fout + D, 128)     # lane-dense output slab width

        kernel = functools.partial(
            _ehon_kernel, N=N, Fin=Fin, Fu=Fu, Fd=Fd, D=D, H=H, Fout=Fout,
            Pu=Pu, Pd=Pd, R0=R0, OUT_W=OUT_W)

        out = pl.pallas_call(
            kernel,
            out_shape=jax.ShapeDtypeStruct((N, OUT_W), jnp.float32),
            compiler_params=pltpu.CompilerParams(
                vmem_limit_bytes=32 * 1024 * 1024),
        )(hx, hxu, hxd, idx_u, idx_d, wp_u, wp_d, wc_pack, bias_pack)

        return out[:, :Fout], out[:, Fout:Fout + D]

    return forward


# ----------------------------------------------------------------------------
# Pure-JAX reference (mirrors the PyTorch forward, dropout = identity).
# ----------------------------------------------------------------------------
def ehon_reference(params, h, h_up, h_down, x, x_up, x_down, b_up, b_down):
    relu = lambda v: jnp.maximum(v, 0.0)
    sigmoid = jax.nn.sigmoid
    mm = lambda a, b: jnp.dot(a, b, precision=jax.lax.Precision.HIGHEST)
    N = h.shape[0]
    b_up_i, b_up_j = b_up
    b_down_j, b_down_i = b_down

    def seg_sum(vals, idx, n):
        return jnp.zeros((n, vals.shape[1]), vals.dtype).at[idx].add(vals)

    def side(h2, x2, bi, bj, w1, b1, w2, b2, wco1, bco1, wco2, bco2, cw_s):
        h_i, h_j = h[bi], h2[bj]
        x_i, x_j = x[bi], x2[bj]
        xm = jnp.sum((x_i - x_j) ** 2, -1, keepdims=True)
        inp = jnp.concatenate([h_i, h_j, xm], -1)
        z = relu(mm(inp, w1) + b1)
        m_in = mm(z, w2) + b2
        m_agg = seg_sum(m_in, bi, N)
        s = relu(mm(m_in, wco1) + bco1)
        scale = sigmoid(mm(s, wco2) + bco2)
        x_agg = cw_s * seg_sum((x_i - x_j) * scale, bi, N)
        return m_agg, x_agg

    m_up, x_up_agg = side(h_up, x_up, b_up_i, b_up_j,
                          params['w1u'], params['b1u'], params['w2u'], params['b2u'],
                          params['wcu1'], params['bcu1'], params['wcu2'], params['bcu2'],
                          params['cw'][0])
    m_down, x_down_agg = side(h_down, x_down, b_down_i, b_down_j,
                              params['w1d'], params['b1d'], params['w2d'], params['b2d'],
                              params['wcd1'], params['bcd1'], params['wcd2'], params['bcd2'],
                              params['cw'][1])
    m = jnp.concatenate([m_up, m_down], -1)
    zc = relu(mm(jnp.concatenate([h, m], -1), params['wc1']) + params['bc1'])
    h_out = mm(zc, params['wc2']) + params['bc2']
    x_out = x + x_up_agg + x_down_agg
    return h_out, x_out


def init_params(key, Fin, Fu, Fd, H, Fout):
    keys = jax.random.split(key, 21)
    u = lambda k, shape, a=0.1: jax.random.uniform(k, shape, jnp.float32, -a, a)
    return dict(
        cw=jax.random.uniform(keys[0], (2,), jnp.float32, -1.0, 1.0),
        w1u=u(keys[1], (Fin + Fu + 1, H)), b1u=u(keys[2], (H,)),
        w2u=u(keys[3], (H, H)), b2u=u(keys[4], (H,)),
        w1d=u(keys[5], (Fin + Fd + 1, H)), b1d=u(keys[6], (H,)),
        w2d=u(keys[7], (H, H)), b2d=u(keys[8], (H,)),
        wc1=u(keys[9], (Fin + 2 * H, H)), bc1=u(keys[10], (H,)),
        wc2=u(keys[11], (H, Fout)), bc2=u(keys[12], (Fout,)),
        wcu1=u(keys[13], (H, H)), bcu1=u(keys[14], (H,)),
        wcu2=u(keys[15], (H, 1)), bcu2=u(keys[16], (1,)),
        wcd1=u(keys[17], (H, H)), bcd1=u(keys[18], (H,)),
        wcd2=u(keys[19], (H, 1)), bcd2=u(keys[20], (1,)),
    )


if __name__ == "__main__":
    key = jax.random.PRNGKey(0)
    N, Nu, Nd = 8, 8, 8          # cells, upper-adjacent cells, lower-adjacent
    Eu, Ed = 16, 16              # boundary relations up / down
    Fin, Fu, Fd = 16, 16, 8      # feature widths
    H, Fout, D = 32, 16, 3       # hidden, output, coordinate dim

    k = jax.random.split(key, 12)
    params = init_params(k[0], Fin, Fu, Fd, H, Fout)
    h = jax.random.normal(k[1], (N, Fin), jnp.float32)
    h_up = jax.random.normal(k[2], (Nu, Fu), jnp.float32)
    h_down = jax.random.normal(k[3], (Nd, Fd), jnp.float32)
    x = jax.random.normal(k[4], (N, D), jnp.float32)
    x_up = jax.random.normal(k[5], (Nu, D), jnp.float32)
    x_down = jax.random.normal(k[6], (Nd, D), jnp.float32)
    b_up_i = jax.random.randint(k[7], (Eu,), 0, N)
    b_up_j = jax.random.randint(k[8], (Eu,), 0, Nu)
    b_down_i = jax.random.randint(k[9], (Ed,), 0, N)
    b_down_j = jax.random.randint(k[10], (Ed,), 0, Nd)
    b_up = (b_up_i, b_up_j)
    b_down = (b_down_j, b_down_i)   # module's forward unpacks b_down as (j, i)

    forward = make_ehon_forward(params)   # parameter packing hoisted here
    h_out, x_out = forward(h, h_up, h_down, x, x_up, x_down, b_up, b_down)
    jax.block_until_ready((h_out, x_out))

    h_ref, x_ref = ehon_reference(
        params, h, h_up, h_down, x, x_up, x_down, b_up, b_down)
    np.testing.assert_allclose(np.asarray(h_out), np.asarray(h_ref),
                               rtol=5e-2, atol=5e-2)
    np.testing.assert_allclose(np.asarray(x_out), np.asarray(x_ref),
                               rtol=5e-2, atol=5e-2)
    print("KERNEL_OK")
</pallas_src>

<mosaic_0001>
module attributes {stable_mosaic.version = 11 : i64} {
  func.func @_ehon_kernel(%arg0: memref<8x19xbf16, #tpu.memory_space<vmem>>, %arg1: memref<8x19xbf16, #tpu.memory_space<vmem>>, %arg2: memref<8x11xbf16, #tpu.memory_space<vmem>>, %arg3: memref<16x2xi32, #tpu.memory_space<vmem>>, %arg4: memref<16x2xi32, #tpu.memory_space<vmem>>, %arg5: memref<144x32xbf16, #tpu.memory_space<vmem>>, %arg6: memref<128x32xbf16, #tpu.memory_space<vmem>>, %arg7: memref<112x32xbf16, #tpu.memory_space<vmem>>, %arg8: memref<80x32xf32, #tpu.memory_space<vmem>>, %arg9: memref<8x128xf32, #tpu.memory_space<vmem>>) attributes {dimension_semantics = [], scalar_prefetch = 0 : i64, scratch_operands = 0 : i64, tpu.core_type = #tpu.core_type<tc>} {
    %c0 = arith.constant 0 : index
    %c0_0 = arith.constant 0 : index
    %0 = vector.load %arg0[%c0, %c0_0] : memref<8x19xbf16, #tpu.memory_space<vmem>>, vector<8x19xbf16>
    %c0_1 = arith.constant 0 : index
    %c0_2 = arith.constant 0 : index
    %1 = vector.load %arg1[%c0_1, %c0_2] : memref<8x19xbf16, #tpu.memory_space<vmem>>, vector<8x19xbf16>
    %c0_3 = arith.constant 0 : index
    %c0_4 = arith.constant 0 : index
    %2 = vector.load %arg2[%c0_3, %c0_4] : memref<8x11xbf16, #tpu.memory_space<vmem>>, vector<8x11xbf16>
    %c0_5 = arith.constant 0 : index
    %c0_6 = arith.constant 0 : index
    %3 = vector.load %arg8[%c0_5, %c0_6] : memref<80x32xf32, #tpu.memory_space<vmem>>, vector<80x32xf32>
    %c0_7 = arith.constant 0 : index
    %c0_8 = arith.constant 0 : index
    %4 = vector.load %arg5[%c0_7, %c0_8] : memref<144x32xbf16, #tpu.memory_space<vmem>>, vector<144x32xbf16>
    %5 = vector.extract_strided_slice %4 {offsets = [0, 0], sizes = [33, 32], strides = [1, 1]} : vector<144x32xbf16> to vector<33x32xbf16>
    %6 = vector.extract_strided_slice %4 {offsets = [48, 0], sizes = [32, 32], strides = [1, 1]} : vector<144x32xbf16> to vector<32x32xbf16>
    %7 = vector.extract_strided_slice %4 {offsets = [80, 0], sizes = [32, 32], strides = [1, 1]} : vector<144x32xbf16> to vector<32x32xbf16>
    %8 = vector.extract_strided_slice %4 {offsets = [112, 0], sizes = [32, 1], strides = [1, 1]} : vector<144x32xbf16> to vector<32x1xbf16>
    %9 = vector.extract_strided_slice %3 {offsets = [0, 0], sizes = [1, 32], strides = [1, 1]} : vector<80x32xf32> to vector<1x32xf32>
    %10 = vector.extract_strided_slice %3 {offsets = [8, 0], sizes = [1, 32], strides = [1, 1]} : vector<80x32xf32> to vector<1x32xf32>
    %11 = vector.extract_strided_slice %3 {offsets = [16, 0], sizes = [1, 32], strides = [1, 1]} : vector<80x32xf32> to vector<1x32xf32>
    %12 = vector.extract_strided_slice %3 {offsets = [24, 0], sizes = [1, 1], strides = [1, 1]} : vector<80x32xf32> to vector<1x1xf32>
    %13 = vector.extract_strided_slice %3 {offsets = [24, 1], sizes = [1, 1], strides = [1, 1]} : vector<80x32xf32> to vector<1x1xf32>
    %c0_9 = arith.constant 0 : index
    %c0_10 = arith.constant 0 : index
    %14 = vector.load %arg3[%c0_9, %c0_10] : memref<16x2xi32, #tpu.memory_space<vmem>>, vector<16x2xi32>
    %15 = vector.extract_strided_slice %14 {offsets = [0, 0], sizes = [16, 1], strides = [1, 1]} : vector<16x2xi32> to vector<16x1xi32>
    %16 = vector.extract_strided_slice %14 {offsets = [0, 1], sizes = [16, 1], strides = [1, 1]} : vector<16x2xi32> to vector<16x1xi32>
    %17 = tpu.iota {dimensions = array<i32: 1>} : vector<16x8xi32>
    %18 = vector.broadcast %15 : vector<16x1xi32> to vector<16x8xi32>
    %19 = arith.cmpi eq, %17, %18 : vector<16x8xi32>
    %20 = arith.extui %19 : vector<16x8xi1> to vector<16x8xi32>
    %21 = arith.sitofp %20 : vector<16x8xi32> to vector<16x8xf32>
    %22 = arith.truncf %21 : vector<16x8xf32> to vector<16x8xbf16>
    %23 = tpu.iota {dimensions = array<i32: 1>} : vector<16x8xi32>
    %24 = vector.broadcast %16 : vector<16x1xi32> to vector<16x8xi32>
    %25 = arith.cmpi eq, %23, %24 : vector<16x8xi32>
    %26 = arith.extui %25 : vector<16x8xi1> to vector<16x8xi32>
    %27 = arith.sitofp %26 : vector<16x8xi32> to vector<16x8xf32>
    %28 = arith.truncf %27 : vector<16x8xf32> to vector<16x8xbf16>
    %cst = arith.constant dense<0.000000e+00> : vector<16x19xf32>
    %29 = tpu.matmul %22, %0, %cst {dimension_numbers = #tpu.dot_dimension_numbers<[1], [0], [0], [1], [0, 0, 1, 1], [], []>} : vector<16x8xbf16>, vector<8x19xbf16>, vector<16x19xf32> -> vector<16x19xf32>
    %cst_11 = arith.constant dense<0.000000e+00> : vector<16x19xf32>
    %30 = tpu.matmul %28, %1, %cst_11 {dimension_numbers = #tpu.dot_dimension_numbers<[1], [0], [0], [1], [0, 0, 1, 1], [], []>} : vector<16x8xbf16>, vector<8x19xbf16>, vector<16x19xf32> -> vector<16x19xf32>
    %31 = vector.extract_strided_slice %29 {offsets = [0, 0], sizes = [16, 16], strides = [1, 1]} : vector<16x19xf32> to vector<16x16xf32>
    %32 = vector.extract_strided_slice %29 {offsets = [0, 16], sizes = [16, 3], strides = [1, 1]} : vector<16x19xf32> to vector<16x3xf32>
    %33 = vector.extract_strided_slice %30 {offsets = [0, 0], sizes = [16, 16], strides = [1, 1]} : vector<16x19xf32> to vector<16x16xf32>
    %34 = vector.extract_strided_slice %30 {offsets = [0, 16], sizes = [16, 3], strides = [1, 1]} : vector<16x19xf32> to vector<16x3xf32>
    %35 = arith.subf %32, %34 : vector<16x3xf32>
    %36 = arith.mulf %35, %35 : vector<16x3xf32>
    %cst_12 = arith.constant dense<0.000000e+00> : vector<16xf32>
    %37 = vector.multi_reduction <add>, %36, %cst_12 [1] : vector<16x3xf32> to vector<16xf32>
    %38 = vector.shape_cast %37 : vector<16xf32> to vector<16x1xf32>
    %39 = tpu.concatenate %31, %33, %38 in 1 : vector<16x16xf32>, vector<16x16xf32>, vector<16x1xf32> -> vector<16x33xf32>
    %40 = arith.truncf %39 : vector<16x33xf32> to vector<16x33xbf16>
    %cst_13 = arith.constant dense<0.000000e+00> : vector<16x32xf32>
    %41 = tpu.matmul %40, %5, %cst_13 {dimension_numbers = #tpu.dot_dimension_numbers<[1], [0], [0], [1], [0, 0, 1, 1], [], []>} : vector<16x33xbf16>, vector<33x32xbf16>, vector<16x32xf32> -> vector<16x32xf32>
    %42 = vector.broadcast %9 : vector<1x32xf32> to vector<16x32xf32>
    %43 = arith.addf %41, %42 : vector<16x32xf32>
    %cst_14 = arith.constant 0.000000e+00 : f32
    %44 = vector.broadcast %cst_14 : f32 to vector<16x32xf32>
    %45 = arith.maximumf %43, %44 : vector<16x32xf32>
    %46 = arith.truncf %45 : vector<16x32xf32> to vector<16x32xbf16>
    %cst_15 = arith.constant dense<0.000000e+00> : vector<16x32xf32>
    %47 = tpu.matmul %46, %6, %cst_15 {dimension_numbers = #tpu.dot_dimension_numbers<[1], [0], [0], [1], [0, 0, 1, 1], [], []>} : vector<16x32xbf16>, vector<32x32xbf16>, vector<16x32xf32> -> vector<16x32xf32>
    %48 = vector.broadcast %10 : vector<1x32xf32> to vector<16x32xf32>
    %49 = arith.addf %47, %48 : vector<16x32xf32>
    %50 = arith.truncf %49 : vector<16x32xf32> to vector<16x32xbf16>
    %cst_16 = arith.constant dense<0.000000e+00> : vector<16x32xf32>
    %51 = tpu.matmul %50, %7, %cst_16 {dimension_numbers = #tpu.dot_dimension_numbers<[1], [0], [0], [1], [0, 0, 1, 1], [], []>} : vector<16x32xbf16>, vector<32x32xbf16>, vector<16x32xf32> -> vector<16x32xf32>
    %52 = vector.broadcast %11 : vector<1x32xf32> to vector<16x32xf32>
    %53 = arith.addf %51, %52 : vector<16x32xf32>
    %cst_17 = arith.constant 0.000000e+00 : f32
    %54 = vector.broadcast %cst_17 : f32 to vector<16x32xf32>
    %55 = arith.maximumf %53, %54 : vector<16x32xf32>
    %56 = arith.truncf %55 : vector<16x32xf32> to vector<16x32xbf16>
    %cst_18 = arith.constant dense<0.000000e+00> : vector<16x1xf32>
    %57 = tpu.matmul %56, %8, %cst_18 {dimension_numbers = #tpu.dot_dimension_numbers<[1], [0], [0], [1], [0, 0, 1, 1], [], []>} : vector<16x32xbf16>, vector<32x1xbf16>, vector<16x1xf32> -> vector<16x1xf32>
    %58 = vector.broadcast %12 : vector<1x1xf32> to vector<16x1xf32>
    %59 = arith.addf %57, %58 : vector<16x1xf32>
    %cst_19 = arith.constant 0.000000e+00 : f32
    %60 = vector.broadcast %cst_19 : f32 to vector<16x1xf32>
    %61 = arith.subf %60, %59 : vector<16x1xf32>
    %62 = math.exp %61 : vector<16x1xf32>
    %cst_20 = arith.constant 1.000000e+00 : f32
    %63 = vector.broadcast %cst_20 : f32 to vector<16x1xf32>
    %64 = arith.addf %63, %62 : vector<16x1xf32>
    %65 = tpu.reciprocal %64 {approx = true} : vector<16x1xf32> -> vector<16x1xf32>
    %66 = vector.broadcast %13 : vector<1x1xf32> to vector<16x1xf32>
    %67 = arith.mulf %65, %66 : vector<16x1xf32>
    %68 = vector.broadcast %67 : vector<16x1xf32> to vector<16x3xf32>
    %69 = arith.mulf %35, %68 : vector<16x3xf32>
    %70 = tpu.concatenate %49, %69 in 1 : vector<16x32xf32>, vector<16x3xf32> -> vector<16x35xf32>
    %71 = arith.truncf %70 : vector<16x35xf32> to vector<16x35xbf16>
    %cst_21 = arith.constant dense<0.000000e+00> : vector<8x35xf32>
    %72 = tpu.matmul %22, %71, %cst_21 {dimension_numbers = #tpu.dot_dimension_numbers<[0], [0], [1], [1], [0, 1, 1, 1], [], []>} : vector<16x8xbf16>, vector<16x35xbf16>, vector<8x35xf32> -> vector<8x35xf32>
    %73 = vector.extract_strided_slice %72 {offsets = [0, 0], sizes = [8, 32], strides = [1, 1]} : vector<8x35xf32> to vector<8x32xf32>
    %74 = vector.extract_strided_slice %72 {offsets = [0, 32], sizes = [8, 3], strides = [1, 1]} : vector<8x35xf32> to vector<8x3xf32>
    %c0_22 = arith.constant 0 : index
    %c0_23 = arith.constant 0 : index
    %75 = vector.load %arg6[%c0_22, %c0_23] : memref<128x32xbf16, #tpu.memory_space<vmem>>, vector<128x32xbf16>
    %76 = vector.extract_strided_slice %75 {offsets = [0, 0], sizes = [25, 32], strides = [1, 1]} : vector<128x32xbf16> to vector<25x32xbf16>
    %77 = vector.extract_strided_slice %75 {offsets = [32, 0], sizes = [32, 32], strides = [1, 1]} : vector<128x32xbf16> to vector<32x32xbf16>
    %78 = vector.extract_strided_slice %75 {offsets = [64, 0], sizes = [32, 32], strides = [1, 1]} : vector<128x32xbf16> to vector<32x32xbf16>
    %79 = vector.extract_strided_slice %75 {offsets = [96, 0], sizes = [32, 1], strides = [1, 1]} : vector<128x32xbf16> to vector<32x1xbf16>
    %80 = vector.extract_strided_slice %3 {offsets = [32, 0], sizes = [1, 32], strides = [1, 1]} : vector<80x32xf32> to vector<1x32xf32>
    %81 = vector.extract_strided_slice %3 {offsets = [40, 0], sizes = [1, 32], strides = [1, 1]} : vector<80x32xf32> to vector<1x32xf32>
    %82 = vector.extract_strided_slice %3 {offsets = [48, 0], sizes = [1, 32], strides = [1, 1]} : vector<80x32xf32> to vector<1x32xf32>
    %83 = vector.extract_strided_slice %3 {offsets = [56, 0], sizes = [1, 1], strides = [1, 1]} : vector<80x32xf32> to vector<1x1xf32>
    %84 = vector.extract_strided_slice %3 {offsets = [56, 1], sizes = [1, 1], strides = [1, 1]} : vector<80x32xf32> to vector<1x1xf32>
    %c0_24 = arith.constant 0 : index
    %c0_25 = arith.constant 0 : index
    %85 = vector.load %arg4[%c0_24, %c0_25] : memref<16x2xi32, #tpu.memory_space<vmem>>, vector<16x2xi32>
    %86 = vector.extract_strided_slice %85 {offsets = [0, 0], sizes = [16, 1], strides = [1, 1]} : vector<16x2xi32> to vector<16x1xi32>
    %87 = vector.extract_strided_slice %85 {offsets = [0, 1], sizes = [16, 1], strides = [1, 1]} : vector<16x2xi32> to vector<16x1xi32>
    %88 = tpu.iota {dimensions = array<i32: 1>} : vector<16x8xi32>
    %89 = vector.broadcast %86 : vector<16x1xi32> to vector<16x8xi32>
    %90 = arith.cmpi eq, %88, %89 : vector<16x8xi32>
    %91 = arith.extui %90 : vector<16x8xi1> to vector<16x8xi32>
    %92 = arith.sitofp %91 : vector<16x8xi32> to vector<16x8xf32>
    %93 = arith.truncf %92 : vector<16x8xf32> to vector<16x8xbf16>
    %94 = tpu.iota {dimensions = array<i32: 1>} : vector<16x8xi32>
    %95 = vector.broadcast %87 : vector<16x1xi32> to vector<16x8xi32>
    %96 = arith.cmpi eq, %94, %95 : vector<16x8xi32>
    %97 = arith.extui %96 : vector<16x8xi1> to vector<16x8xi32>
    %98 = arith.sitofp %97 : vector<16x8xi32> to vector<16x8xf32>
    %99 = arith.truncf %98 : vector<16x8xf32> to vector<16x8xbf16>
    %cst_26 = arith.constant dense<0.000000e+00> : vector<16x19xf32>
    %100 = tpu.matmul %93, %0, %cst_26 {dimension_numbers = #tpu.dot_dimension_numbers<[1], [0], [0], [1], [0, 0, 1, 1], [], []>} : vector<16x8xbf16>, vector<8x19xbf16>, vector<16x19xf32> -> vector<16x19xf32>
    %cst_27 = arith.constant dense<0.000000e+00> : vector<16x11xf32>
    %101 = tpu.matmul %99, %2, %cst_27 {dimension_numbers = #tpu.dot_dimension_numbers<[1], [0], [0], [1], [0, 0, 1, 1], [], []>} : vector<16x8xbf16>, vector<8x11xbf16>, vector<16x11xf32> -> vector<16x11xf32>
    %102 = vector.extract_strided_slice %100 {offsets = [0, 0], sizes = [16, 16], strides = [1, 1]} : vector<16x19xf32> to vector<16x16xf32>
    %103 = vector.extract_strided_slice %100 {offsets = [0, 16], sizes = [16, 3], strides = [1, 1]} : vector<16x19xf32> to vector<16x3xf32>
    %104 = vector.extract_strided_slice %101 {offsets = [0, 0], sizes = [16, 8], strides = [1, 1]} : vector<16x11xf32> to vector<16x8xf32>
    %105 = vector.extract_strided_slice %101 {offsets = [0, 8], sizes = [16, 3], strides = [1, 1]} : vector<16x11xf32> to vector<16x3xf32>
    %106 = arith.subf %103, %105 : vector<16x3xf32>
    %107 = arith.mulf %106, %106 : vector<16x3xf32>
    %cst_28 = arith.constant dense<0.000000e+00> : vector<16xf32>
    %108 = vector.multi_reduction <add>, %107, %cst_28 [1] : vector<16x3xf32> to vector<16xf32>
    %109 = vector.shape_cast %108 : vector<16xf32> to vector<16x1xf32>
    %110 = tpu.concatenate %102, %104, %109 in 1 : vector<16x16xf32>, vector<16x8xf32>, vector<16x1xf32> -> vector<16x25xf32>
    %111 = arith.truncf %110 : vector<16x25xf32> to vector<16x25xbf16>
    %cst_29 = arith.constant dense<0.000000e+00> : vector<16x32xf32>
    %112 = tpu.matmul %111, %76, %cst_29 {dimension_numbers = #tpu.dot_dimension_numbers<[1], [0], [0], [1], [0, 0, 1, 1], [], []>} : vector<16x25xbf16>, vector<25x32xbf16>, vector<16x32xf32> -> vector<16x32xf32>
    %113 = vector.broadcast %80 : vector<1x32xf32> to vector<16x32xf32>
    %114 = arith.addf %112, %113 : vector<16x32xf32>
    %cst_30 = arith.constant 0.000000e+00 : f32
    %115 = vector.broadcast %cst_30 : f32 to vector<16x32xf32>
    %116 = arith.maximumf %114, %115 : vector<16x32xf32>
    %117 = arith.truncf %116 : vector<16x32xf32> to vector<16x32xbf16>
    %cst_31 = arith.constant dense<0.000000e+00> : vector<16x32xf32>
    %118 = tpu.matmul %117, %77, %cst_31 {dimension_numbers = #tpu.dot_dimension_numbers<[1], [0], [0], [1], [0, 0, 1, 1], [], []>} : vector<16x32xbf16>, vector<32x32xbf16>, vector<16x32xf32> -> vector<16x32xf32>
    %119 = vector.broadcast %81 : vector<1x32xf32> to vector<16x32xf32>
    %120 = arith.addf %118, %119 : vector<16x32xf32>
    %121 = arith.truncf %120 : vector<16x32xf32> to vector<16x32xbf16>
    %cst_32 = arith.constant dense<0.000000e+00> : vector<16x32xf32>
    %122 = tpu.matmul %121, %78, %cst_32 {dimension_numbers = #tpu.dot_dimension_numbers<[1], [0], [0], [1], [0, 0, 1, 1], [], []>} : vector<16x32xbf16>, vector<32x32xbf16>, vector<16x32xf32> -> vector<16x32xf32>
    %123 = vector.broadcast %82 : vector<1x32xf32> to vector<16x32xf32>
    %124 = arith.addf %122, %123 : vector<16x32xf32>
    %cst_33 = arith.constant 0.000000e+00 : f32
    %125 = vector.broadcast %cst_33 : f32 to vector<16x32xf32>
    %126 = arith.maximumf %124, %125 : vector<16x32xf32>
    %127 = arith.truncf %126 : vector<16x32xf32> to vector<16x32xbf16>
    %cst_34 = arith.constant dense<0.000000e+00> : vector<16x1xf32>
    %128 = tpu.matmul %127, %79, %cst_34 {dimension_numbers = #tpu.dot_dimension_numbers<[1], [0], [0], [1], [0, 0, 1, 1], [], []>} : vector<16x32xbf16>, vector<32x1xbf16>, vector<16x1xf32> -> vector<16x1xf32>
    %129 = vector.broadcast %83 : vector<1x1xf32> to vector<16x1xf32>
    %130 = arith.addf %128, %129 : vector<16x1xf32>
    %cst_35 = arith.constant 0.000000e+00 : f32
    %131 = vector.broadcast %cst_35 : f32 to vector<16x1xf32>
    %132 = arith.subf %131, %130 : vector<16x1xf32>
    %133 = math.exp %132 : vector<16x1xf32>
    %cst_36 = arith.constant 1.000000e+00 : f32
    %134 = vector.broadcast %cst_36 : f32 to vector<16x1xf32>
    %135 = arith.addf %134, %133 : vector<16x1xf32>
    %136 = tpu.reciprocal %135 {approx = true} : vector<16x1xf32> -> vector<16x1xf32>
    %137 = vector.broadcast %84 : vector<1x1xf32> to vector<16x1xf32>
    %138 = arith.mulf %136, %137 : vector<16x1xf32>
    %139 = vector.broadcast %138 : vector<16x1xf32> to vector<16x3xf32>
    %140 = arith.mulf %106, %139 : vector<16x3xf32>
    %141 = tpu.concatenate %120, %140 in 1 : vector<16x32xf32>, vector<16x3xf32> -> vector<16x35xf32>
    %142 = arith.truncf %141 : vector<16x35xf32> to vector<16x35xbf16>
    %cst_37 = arith.constant dense<0.000000e+00> : vector<8x35xf32>
    %143 = tpu.matmul %93, %142, %cst_37 {dimension_numbers = #tpu.dot_dimension_numbers<[0], [0], [1], [1], [0, 1, 1, 1], [], []>} : vector<16x8xbf16>, vector<16x35xbf16>, vector<8x35xf32> -> vector<8x35xf32>
    %144 = vector.extract_strided_slice %143 {offsets = [0, 0], sizes = [8, 32], strides = [1, 1]} : vector<8x35xf32> to vector<8x32xf32>
    %145 = vector.extract_strided_slice %143 {offsets = [0, 32], sizes = [8, 3], strides = [1, 1]} : vector<8x35xf32> to vector<8x3xf32>
    %c0_38 = arith.constant 0 : index
    %c0_39 = arith.constant 0 : index
    %146 = vector.load %arg7[%c0_38, %c0_39] : memref<112x32xbf16, #tpu.memory_space<vmem>>, vector<112x32xbf16>
    %147 = vector.extract_strided_slice %146 {offsets = [0, 0], sizes = [80, 32], strides = [1, 1]} : vector<112x32xbf16> to vector<80x32xbf16>
    %148 = vector.extract_strided_slice %146 {offsets = [80, 0], sizes = [32, 16], strides = [1, 1]} : vector<112x32xbf16> to vector<32x16xbf16>
    %149 = vector.extract_strided_slice %3 {offsets = [64, 0], sizes = [1, 32], strides = [1, 1]} : vector<80x32xf32> to vector<1x32xf32>
    %150 = vector.extract_strided_slice %3 {offsets = [72, 0], sizes = [1, 16], strides = [1, 1]} : vector<80x32xf32> to vector<1x16xf32>
    %151 = vector.extract_strided_slice %0 {offsets = [0, 0], sizes = [8, 16], strides = [1, 1]} : vector<8x19xbf16> to vector<8x16xbf16>
    %152 = arith.truncf %73 : vector<8x32xf32> to vector<8x32xbf16>
    %153 = arith.truncf %144 : vector<8x32xf32> to vector<8x32xbf16>
    %154 = tpu.concatenate %151, %152, %153 in 1 : vector<8x16xbf16>, vector<8x32xbf16>, vector<8x32xbf16> -> vector<8x80xbf16>
    %cst_40 = arith.constant dense<0.000000e+00> : vector<8x32xf32>
    %155 = tpu.matmul %154, %147, %cst_40 {dimension_numbers = #tpu.dot_dimension_numbers<[1], [0], [0], [1], [0, 0, 1, 1], [], []>} : vector<8x80xbf16>, vector<80x32xbf16>, vector<8x32xf32> -> vector<8x32xf32>
    %156 = vector.broadcast %149 : vector<1x32xf32> to vector<8x32xf32>
    %157 = arith.addf %155, %156 : vector<8x32xf32>
    %cst_41 = arith.constant 0.000000e+00 : f32
    %158 = vector.broadcast %cst_41 : f32 to vector<8x32xf32>
    %159 = arith.maximumf %157, %158 : vector<8x32xf32>
    %160 = arith.truncf %159 : vector<8x32xf32> to vector<8x32xbf16>
    %cst_42 = arith.constant dense<0.000000e+00> : vector<8x16xf32>
    %161 = tpu.matmul %160, %148, %cst_42 {dimension_numbers = #tpu.dot_dimension_numbers<[1], [0], [0], [1], [0, 0, 1, 1], [], []>} : vector<8x32xbf16>, vector<32x16xbf16>, vector<8x16xf32> -> vector<8x16xf32>
    %162 = vector.broadcast %150 : vector<1x16xf32> to vector<8x16xf32>
    %163 = arith.addf %161, %162 : vector<8x16xf32>
    %164 = vector.extract_strided_slice %0 {offsets = [0, 16], sizes = [8, 3], strides = [1, 1]} : vector<8x19xbf16> to vector<8x3xbf16>
    %165 = arith.extf %164 : vector<8x3xbf16> to vector<8x3xf32>
    %166 = arith.addf %165, %74 : vector<8x3xf32>
    %167 = arith.addf %166, %145 : vector<8x3xf32>
    %cst_43 = arith.constant 0.000000e+00 : f32
    %168 = vector.broadcast %cst_43 : f32 to vector<8x109xf32>
    %169 = tpu.concatenate %163, %167, %168 in 1 : vector<8x16xf32>, vector<8x3xf32>, vector<8x109xf32> -> vector<8x128xf32>
    %c0_44 = arith.constant 0 : index
    %c0_45 = arith.constant 0 : index
    %170 = vector.load %arg9[%c0_44, %c0_45] : memref<8x128xf32, #tpu.memory_space<vmem>>, vector<8x128xf32>
    tpu.vector_store %arg9[%c0_44, %c0_45], %169 {strides = array<i32>} : memref<8x128xf32, #tpu.memory_space<vmem>>, vector<8x128xf32>,
    return
  }
}

</mosaic_0001>

<llo_original>
// kernel: forward.1
$region0: #{forward.1}
  #allocation0 [shape = 'u32[]', space=smem, size = 0x4, offset = 0x4, fixed_abs, tag = 'smem constant byte address 0x4 - core index']
  #allocation1 [shape = 'u32[144,128]{1,0:T(1,128)}', space=vmem, size = 0x12000, scoped, tag = 'internal scratch']
  %s0 = inlined_call_operand.vmem [shape: bf16[8,19], index: 0, kind: input, shape index: {}]
  %s1 = inlined_call_operand.vmem [shape: bf16[8,19], index: 1, kind: input, shape index: {}]
  %s2 = inlined_call_operand.vmem [shape: bf16[8,11], index: 2, kind: input, shape index: {}]
  %s3 = inlined_call_operand.vmem [shape: s32[16,2], index: 3, kind: input, shape index: {}]
  %s4 = inlined_call_operand.vmem [shape: s32[16,2], index: 4, kind: input, shape index: {}]
  %s5 = inlined_call_operand.vmem [shape: bf16[144,32], index: 5, kind: input, shape index: {}]
  %s6 = inlined_call_operand.vmem [shape: bf16[128,32], index: 6, kind: input, shape index: {}]
  %s7 = inlined_call_operand.hbm [shape: bf16[112,32], index: 7, kind: input, shape index: {}]
  %s8 = inlined_call_operand.vmem [shape: f32[80,32], index: 8, kind: input, shape index: {}]
  %s9 = inlined_call_operand.vmem [shape: f32[8,128], index: 9, kind: output, shape index: {}]
  %s10 = sld [smem:[#allocation0]]
  $region50: #{forward.1} parent=0
    _
  %s12 = ssub.s32 1, %s10
  %s13 = scalar_select 0, %s12, %s10
  $region1: #{forward.1} parent=0
    #allocation2 [shape = 'u8[28672]{0}', space=vmem, size = 0x7000, scoped, tag = 'input window, operand 7, single buffered']
    #allocation3 [shape = 's32[1]{0}', space=sflag, size = 0x4, scoped, tag = 'scoped memory for forward.1']
    %14 = vsyncpa [#allocation3], 0
    // Predicated region
    $region2: #{forward.1} parent=1 // pred_check
      _
    $region3: #{forward.1} parent=1 // pred_check_branch
      %16 = sbr.rel (0) target = $region5
    $region4: #{forward.1} parent=1 // pred_region
      _
    $region5: #{forward.1} parent=1 // pred_fallthru
      _
    // Predicated region
    $region6: #{forward.1} parent=1 // pred_check
      _
    $region7: #{forward.1} parent=1 // pred_check_branch
      %18 = sbr.rel (0) target = $region9
    $region8: #{forward.1} parent=1 // pred_region
      _
    $region9: #{forward.1} parent=1 // pred_fallthru
      _
    // Predicated region
    $region10: #{forward.1} parent=1 // pred_check
      _
    $region11: #{forward.1} parent=1 // pred_check_branch
      %20 = sbr.rel (0) target = $region13
    $region12: #{forward.1} parent=1 // pred_region
      _
    $region13: #{forward.1} parent=1 // pred_fallthru
      _
    // Predicated region
    $region14: #{forward.1} parent=1 // pred_check
      _
    $region15: #{forward.1} parent=1 // pred_check_branch
      %22 = sbr.rel (0) target = $region17
    $region16: #{forward.1} parent=1 // pred_region
      _
    $region17: #{forward.1} parent=1 // pred_fallthru
      _
    // Predicated region
    $region18: #{forward.1} parent=1 // pred_check
      _
    $region19: #{forward.1} parent=1 // pred_check_branch
      %24 = sbr.rel (0) target = $region21
    $region20: #{forward.1} parent=1 // pred_region
      _
    $region21: #{forward.1} parent=1 // pred_fallthru
      _
    // Predicated region
    $region22: #{forward.1} parent=1 // pred_check
      _
    $region23: #{forward.1} parent=1 // pred_check_branch
      %26 = sbr.rel (0) target = $region25
    $region24: #{forward.1} parent=1 // pred_region
      _
    $region25: #{forward.1} parent=1 // pred_fallthru
      _
    // Predicated region
    $region26: #{forward.1} parent=1 // pred_check
      _
    $region27: #{forward.1} parent=1 // pred_check_branch
      %28 = sbr.rel (0) target = $region29
    $region28: #{forward.1} parent=1 // pred_region
      _
    $region29: #{forward.1} parent=1 // pred_fallthru
      _
    // Predicated region
    $region30: #{forward.1} parent=1 // pred_check
      _
    $region31: #{forward.1} parent=1 // pred_check_branch
      %30 = sbr.rel (0) target = $region33
    $region32: #{forward.1} parent=1 // pred_region
      %s32 = ssub.s32 896, 896
      %33 = vsyncadd [#allocation3], %s32
      %s34 = sshll.u32 [#allocation2], 4
      %s35 = int_to_ptr.vmem [resolvable:$true] %s34
      %40 = dma.hbm_to_vmem [thread:$0]  %s7, 896, %s35, [#allocation3], 64, 64, 4
    $region33: #{forward.1} parent=1 // pred_fallthru
      _
    // Predicated region
    $region34: #{forward.1} parent=1 // pred_check
      _
    $region35: #{forward.1} parent=1 // pred_check_branch
      %42 = sbr.rel (0) target = $region37
    $region36: #{forward.1} parent=1 // pred_region
      _
    $region37: #{forward.1} parent=1 // pred_fallthru
      _
    // Predicated region
    $region38: #{forward.1} parent=1 // pred_check
      _
    $region39: #{forward.1} parent=1 // pred_check_branch
      %44 = sbr.rel (0) target = $region41
    $region40: #{forward.1} parent=1 // pred_region
      %45 = dma.done [#allocation3], 896
    $region41: #{forward.1} parent=1 // pred_fallthru
      _
    %v47 = vld [vmem:[%s0] sm:$0xf]
    %v48 = vld [vmem:[%s1] sm:$0xf]
    %v49 = vld [vmem:[%s2] sm:$0xf]
    %v50 = vld [vmem:[%s8] sm:$0xff]
    %v51 = vld [vmem:[%s8 + $0x8] sm:$0xff]
    %v52 = vld [vmem:[%s8 + $0x10] sm:$0xff]
    %v53 = vld [vmem:[%s8 + $0x18] sm:$0xff]
    %v54 = vld [vmem:[%s8 + $0x20] sm:$0xff]
    %v55 = vld [vmem:[%s8 + $0x28] sm:$0xff]
    %v56 = vld [vmem:[%s8 + $0x30] sm:$0xff]
    %v57 = vld [vmem:[%s8 + $0x38] sm:$0xff]
    %v58 = vld [vmem:[%s8 + $0x40] sm:$0xff]
    %v59 = vld [vmem:[%s8 + $0x48] sm:$0xff]
    %v60 = vld [vmem:[%s5] sm:$0xf]
    %v61 = vld [vmem:[%s5 + $0x4] sm:$0xf]
    %v62 = vld [vmem:[%s5 + $0x8] sm:$0xf]
    %v63 = vld [vmem:[%s5 + $0xc] sm:$0xf]
    %v64 = vld [vmem:[%s5 + $0x10] sm:$0xf]
    %v65 = vld [vmem:[%s5 + $0x18] sm:$0xf]
    %v66 = vld [vmem:[%s5 + $0x1c] sm:$0xf]
    %v67 = vld [vmem:[%s5 + $0x20] sm:$0xf]
    %v68 = vld [vmem:[%s5 + $0x24] sm:$0xf]
    %v69 = vld [vmem:[%s5 + $0x28] sm:$0xf]
    %v70 = vld [vmem:[%s5 + $0x2c] sm:$0xf]
    %v71 = vld [vmem:[%s5 + $0x30] sm:$0xf]
    %v72 = vld [vmem:[%s5 + $0x34] sm:$0xf]
    %v73 = vld [vmem:[%s5 + $0x38] sm:$0xf]
    %v74 = vld [vmem:[%s5 + $0x3c] sm:$0xf]
    %v75 = vld [vmem:[%s5 + $0x40] sm:$0xf]
    %v76 = vld [vmem:[%s5 + $0x44] sm:$0xf]
    %v77 = vld [vmem:[%s3] sm:$0xff]
    %v78 = vld [vmem:[%s3 + $0x8] sm:$0xff]
    %v79 = vlaneseq
    %v80 = vand.u32 %v79, 127
    %81 = vset.pattern.permute.xlu0 0
    %82 = vperm.xlu0 %81, %v77
    %v83 = vpop.permute.xlu0 %82
    %84 = vset.pattern.permute.xlu0 0
    %85 = vperm.xlu0 %84, %v78
    %v86 = vpop.permute.xlu0 %85
    %vm87 = vcmp.eq.s32.totalorder %v80, %v83
    %vm88 = vcmp.eq.s32.totalorder %v80, %v86
    %v89 = vsel %vm87, 1, 0
    %v90 = vsel %vm88, 1, 0
    %v91 = vcvt.s32.f32 %v89
    %v92 = vcvt.s32.f32 %v90
    %v93 = vpack.c.bf16 %v92, %v91
    %94 = vset.pattern.permute.xlu0 1
    %95 = vperm.xlu0 %94, %v77
    %v96 = vpop.permute.xlu0 %95
    %97 = vset.pattern.permute.xlu0 1
    %98 = vperm.xlu0 %97, %v78
    %v99 = vpop.permute.xlu0 %98
    %vm100 = vcmp.eq.s32.totalorder %v80, %v96
    %vm101 = vcmp.eq.s32.totalorder %v80, %v99
    %v102 = vsel %vm100, 1, 0
    %v103 = vsel %vm101, 1, 0
    %v104 = vcvt.s32.f32 %v102
    %v105 = vcvt.s32.f32 %v103
    %v106 = vpack.c.bf16 %v105, %v104
    %vm107 = vcmask 64512
    %v109 = vsel %vm107, %v93, 0
    %vm111 = vcmask 1043456
    %v113 = vsel %vm111, %v47, 0
    %115 = vmatprep.subr.bf16.mxu0 0
    %116 = vmatpush1.bf16.msra.mxu0 %v113
    %117 = vmatprep.subr.bf16.mxu0 0
    %118 = vmatpush1.bf16.msra.mxu0 0
    %119 = vmatprep.subr.bf16.mxu0 0
    %120 = vmatpush1.bf16.msra.mxu0 0
    %121 = vmatprep.subr.bf16.mxu0 0
    %122 = vmatpush1.bf16.msra.mxu0 0
    %123 = vmatprep.subr.bf16.mxu0 0
    %124 = vmatpush1.bf16.msra.mxu0 0
    %125 = vmatprep.subr.bf16.mxu0 0
    %126 = vmatpush1.bf16.msra.mxu0 0
    %127 = vmatprep.subr.bf16.mxu0 0
    %128 = vmatpush1.bf16.msra.mxu0 0
    %129 = vmatprep.subr.bf16.mxu0 0
    %130 = vmatpush1.bf16.msra.mxu0 0
    %131 = vmatprep.subr.bf16.mxu0 0
    %132 = vmatpush1.bf16.msra.mxu0 0
    %133 = vmatprep.subr.bf16.mxu0 0
    %134 = vmatpush1.bf16.msra.mxu0 0
    %135 = vmatprep.subr.bf16.mxu0 0
    %136 = vmatpush1.bf16.msra.mxu0 0
    %137 = vmatprep.subr.bf16.mxu0 0
    %138 = vmatpush1.bf16.msra.mxu0 0
    %139 = vmatprep.subr.bf16.mxu0 0
    %140 = vmatpush1.bf16.msra.mxu0 0
    %141 = vmatprep.subr.bf16.mxu0 0
    %142 = vmatpush1.bf16.msra.mxu0 0
    %143 = vmatprep.subr.bf16.mxu0 0
    %144 = vmatpush1.bf16.msra.mxu0 0
    %145 = vmatprep.subr.bf16.mxu0 0
    %146 = vmatpush1.bf16.msra.mxu0 0
    %147 = vmatprep.mubr.bf16.mxu0 0
    %148 = vmatmul.mubr.bf16.gmra.mrb[0].mxu0 %v109
    %v149 = vpop.f32.mrb[0].mxu0
    %v150 = vadd.f32 0.0, %v149
    %v151 = vpop.f32.mrb[0].mxu0
    %v152 = vpop.f32.mrb[0].mxu0
    %v153 = vadd.f32 0.0, %v152
    %v154 = vpop.f32.mrb[0].mxu0
    %155 = vdwg.mxu0
    %v157 = vsel %vm107, %v106, 0
    %v160 = vsel %vm111, %v48, 0
    %162 = vmatprep.subr.bf16.mxu0 0
    %163 = vmatpush1.bf16.msra.mxu0 %v160
    %164 = vmatprep.subr.bf16.mxu0 0
    %165 = vmatpush1.bf16.msra.mxu0 0
    %166 = vmatprep.subr.bf16.mxu0 0
    %167 = vmatpush1.bf16.msra.mxu0 0
    %168 = vmatprep.subr.bf16.mxu0 0
    %169 = vmatpush1.bf16.msra.mxu0 0
    %170 = vmatprep.subr.bf16.mxu0 0
    %171 = vmatpush1.bf16.msra.mxu0 0
    %172 = vmatprep.subr.bf16.mxu0 0
    %173 = vmatpush1.bf16.msra.mxu0 0
    %174 = vmatprep.subr.bf16.mxu0 0
    %175 = vmatpush1.bf16.msra.mxu0 0
    %176 = vmatprep.subr.bf16.mxu0 0
    %177 = vmatpush1.bf16.msra.mxu0 0
    %178 = vmatprep.subr.bf16.mxu0 0
    %179 = vmatpush1.bf16.msra.mxu0 0
    %180 = vmatprep.subr.bf16.mxu0 0
    %181 = vmatpush1.bf16.msra.mxu0 0
    %182 = vmatprep.subr.bf16.mxu0 0
    %183 = vmatpush1.bf16.msra.mxu0 0
    %184 = vmatprep.subr.bf16.mxu0 0
    %185 = vmatpush1.bf16.msra.mxu0 0
    %186 = vmatprep.subr.bf16.mxu0 0
    %187 = vmatpush1.bf16.msra.mxu0 0
    %188 = vmatprep.subr.bf16.mxu0 0
    %189 = vmatpush1.bf16.msra.mxu0 0
    %190 = vmatprep.subr.bf16.mxu0 0
    %191 = vmatpush1.bf16.msra.mxu0 0
    %192 = vmatprep.subr.bf16.mxu0 0
    %193 = vmatpush1.bf16.msra.mxu0 0
    %194 = vmatprep.mubr.bf16.mxu0 0
    %195 = vmatmul.mubr.bf16.gmra.mrb[0].mxu0 %v157
    %v196 = vpop.f32.mrb[0].mxu0
    %v197 = vadd.f32 0.0, %v196
    %v198 = vpop.f32.mrb[0].mxu0
    %v199 = vpop.f32.mrb[0].mxu0
    %v200 = vadd.f32 0.0, %v199
    %v201 = vpop.f32.mrb[0].mxu0
    %202 = vdwg.mxu0
    %v203 = vsub.f32 %v150, %v197
    %v204 = vsub.f32 %v153, %v200
    %v205 = vmul.f32 %v203, %v203
    %v206 = vmul.f32 %v204, %v204
    %209 = vrot.lane.b32.xlu0 %v205, 112
    %v210 = vpop.permute.xlu0 %209
    %211 = vrot.lane.b32.xlu0 %v206, 112
    %v212 = vpop.permute.xlu0 %211
    %vm215 = vcmask 23552
    %v216 = vsel %vm215, %v210, 0.0
    %217 = vadd.xlane.f32.xlu0 %v216
    %v218 = vpop.xlane.xlu0 %217
    %v219 = vsel %vm215, %v212, 0.0
    %220 = vadd.xlane.f32.xlu0 %v219
    %v221 = vpop.xlane.xlu0 %220
    %224 = vrot.lane.b32.xlu0 %v197, 16
    %v225 = vpop.permute.xlu0 %224
    %226 = vrot.lane.b32.xlu0 %v200, 16
    %v227 = vpop.permute.xlu0 %226
    %vm230 = vcmask 130048
    %v231 = vsel %vm230, %v150, %v225
    %v232 = vsel %vm230, %v153, %v227
    %vm233 = vcmask 261120
    %v234 = vsel %vm233, %v231, %v218
    %v235 = vsel %vm233, %v232, %v221
    %v236 = vpack.c.bf16 %v235, %v234
    %v237 = vlaneseq
    %v238 = vshrl.u32 %v237, 7
    %v239 = vsub.s32 0, %v238
    %v240 = vrot.slane %v50, %v239
    %v246 = vunpack.c.l.b16 %v60
    %v247 = vunpack.c.l.b16 %v61
    %v248 = vunpack.c.l.b16 %v62
    %v249 = vunpack.c.l.b16 %v63
    %v250 = vunpack.c.l.b16 %v64
    %v251 = vpack.c.b16 %v247, %v246
    %v252 = vpack.c.b16 %v249, %v248
    %v253 = vpack.c.b16 %v250, %v250
    %vm256 = vcmask 269312
    %v258 = vsel %vm256, %v236, 0
    %vm260 = vcmask 1040384
    %v261 = vsel 0, 4294967295, 65535
    %v262 = vsel %vm260, %v261, 0
    %v264 = vand.u32 %v253, %v262
    %266 = vmatprep.subr.bf16.mxu0 0
    %267 = vmatpush1.bf16.msra.mxu0 %v251
    %268 = vmatprep.subr.bf16.mxu0 0
    %269 = vmatpush1.bf16.msra.mxu0 %v252
    %270 = vmatprep.subr.bf16.mxu0 0
    %271 = vmatpush1.bf16.msra.mxu0 %v264
    %272 = vmatprep.subr.bf16.mxu0 0
    %273 = vmatpush1.bf16.msra.mxu0 0
    %274 = vmatprep.subr.bf16.mxu0 0
    %275 = vmatpush1.bf16.msra.mxu0 0
    %276 = vmatprep.subr.bf16.mxu0 0
    %277 = vmatpush1.bf16.msra.mxu0 0
    %278 = vmatprep.subr.bf16.mxu0 0
    %279 = vmatpush1.bf16.msra.mxu0 0
    %280 = vmatprep.subr.bf16.mxu0 0
    %281 = vmatpush1.bf16.msra.mxu0 0
    %282 = vmatprep.subr.bf16.mxu0 0
    %283 = vmatpush1.bf16.msra.mxu0 0
    %284 = vmatprep.subr.bf16.mxu0 0
    %285 = vmatpush1.bf16.msra.mxu0 0
    %286 = vmatprep.subr.bf16.mxu0 0
    %287 = vmatpush1.bf16.msra.mxu0 0
    %288 = vmatprep.subr.bf16.mxu0 0
    %289 = vmatpush1.bf16.msra.mxu0 0
    %290 = vmatprep.subr.bf16.mxu0 0
    %291 = vmatpush1.bf16.msra.mxu0 0
    %292 = vmatprep.subr.bf16.mxu0 0
    %293 = vmatpush1.bf16.msra.mxu0 0
    %294 = vmatprep.subr.bf16.mxu0 0
    %295 = vmatpush1.bf16.msra.mxu0 0
    %296 = vmatprep.subr.bf16.mxu0 0
    %297 = vmatpush1.bf16.msra.mxu0 0
    %298 = vmatprep.mubr.bf16.mxu0 0
    %299 = vmatmul.mubr.bf16.gmra.mrb[0].mxu0 %v258
    %v300 = vpop.f32.mrb[0].mxu0
    %v301 = vadd.f32 %v240, %v300
    %v302 = vpop.f32.mrb[0].mxu0
    %v303 = vpop.f32.mrb[0].mxu0
    %v304 = vadd.f32 %v240, %v303
    %v305 = vpop.f32.mrb[0].mxu0
    %306 = vdwg.mxu0
    %v307 = vmax.f32 %v301, 0.0
    %v308 = vmax.f32 %v304, 0.0
    %v309 = vpack.c.bf16 %v308, %v307
    %v310 = vlaneseq
    %v311 = vshrl.u32 %v310, 7
    %v312 = vsub.s32 0, %v311
    %v313 = vrot.slane %v51, %v312
    %v318 = vunpack.c.l.b16 %v65
    %v319 = vunpack.c.l.b16 %v66
    %v320 = vunpack.c.l.b16 %v67
    %v321 = vunpack.c.l.b16 %v68
    %v322 = vpack.c.b16 %v319, %v318
    %v323 = vpack.c.b16 %v321, %v320
    %v327 = vsel %vm233, %v309, 0
    %329 = vmatprep.subr.bf16.mxu0 0
    %330 = vmatpush1.bf16.msra.mxu0 %v322
    %331 = vmatprep.subr.bf16.mxu0 0
    %332 = vmatpush1.bf16.msra.mxu0 %v323
    %333 = vmatprep.subr.bf16.mxu0 0
    %334 = vmatpush1.bf16.msra.mxu0 0
    %335 = vmatprep.subr.bf16.mxu0 0
    %336 = vmatpush1.bf16.msra.mxu0 0
    %337 = vmatprep.subr.bf16.mxu0 0
    %338 = vmatpush1.bf16.msra.mxu0 0
    %339 = vmatprep.subr.bf16.mxu0 0
    %340 = vmatpush1.bf16.msra.mxu0 0
    %341 = vmatprep.subr.bf16.mxu0 0
    %342 = vmatpush1.bf16.msra.mxu0 0
    %343 = vmatprep.subr.bf16.mxu0 0
    %344 = vmatpush1.bf16.msra.mxu0 0
    %345 = vmatprep.subr.bf16.mxu0 0
    %346 = vmatpush1.bf16.msra.mxu0 0
    %347 = vmatprep.subr.bf16.mxu0 0
    %348 = vmatpush1.bf16.msra.mxu0 0
    %349 = vmatprep.subr.bf16.mxu0 0
    %350 = vmatpush1.bf16.msra.mxu0 0
    %351 = vmatprep.subr.bf16.mxu0 0
    %352 = vmatpush1.bf16.msra.mxu0 0
    %353 = vmatprep.subr.bf16.mxu0 0
    %354 = vmatpush1.bf16.msra.mxu0 0
    %355 = vmatprep.subr.bf16.mxu0 0
    %356 = vmatpush1.bf16.msra.mxu0 0
    %357 = vmatprep.subr.bf16.mxu0 0
    %358 = vmatpush1.bf16.msra.mxu0 0
    %359 = vmatprep.subr.bf16.mxu0 0
    %360 = vmatpush1.bf16.msra.mxu0 0
    %361 = vmatprep.mubr.bf16.mxu0 0
    %362 = vmatmul.mubr.bf16.gmra.mrb[0].mxu0 %v327
    %v363 = vpop.f32.mrb[0].mxu0
    %v364 = vadd.f32 %v313, %v363
    %v365 = vpop.f32.mrb[0].mxu0
    %v366 = vpop.f32.mrb[0].mxu0
    %v367 = vadd.f32 %v313, %v366
    %v368 = vpop.f32.mrb[0].mxu0
    %369 = vdwg.mxu0
    %v370 = vpack.c.bf16 %v367, %v364
    %v371 = vlaneseq
    %v372 = vshrl.u32 %v371, 7
    %v373 = vsub.s32 0, %v372
    %v374 = vrot.slane %v52, %v373
    %v379 = vunpack.c.l.b16 %v69
    %v380 = vunpack.c.l.b16 %v70
    %v381 = vunpack.c.l.b16 %v71
    %v382 = vunpack.c.l.b16 %v72
    %v383 = vpack.c.b16 %v380, %v379
    %v384 = vpack.c.b16 %v382, %v381
    %v388 = vsel %vm233, %v370, 0
    %390 = vmatprep.subr.bf16.mxu0 0
    %391 = vmatpush1.bf16.msra.mxu0 %v383
    %392 = vmatprep.subr.bf16.mxu0 0
    %393 = vmatpush1.bf16.msra.mxu0 %v384
    %394 = vmatprep.subr.bf16.mxu0 0
    %395 = vmatpush1.bf16.msra.mxu0 0
    %396 = vmatprep.subr.bf16.mxu0 0
    %397 = vmatpush1.bf16.msra.mxu0 0
    %398 = vmatprep.subr.bf16.mxu0 0
    %399 = vmatpush1.bf16.msra.mxu0 0
    %400 = vmatprep.subr.bf16.mxu0 0
    %401 = vmatpush1.bf16.msra.mxu0 0
    %402 = vmatprep.subr.bf16.mxu0 0
    %403 = vmatpush1.bf16.msra.mxu0 0
    %404 = vmatprep.subr.bf16.mxu0 0
    %405 = vmatpush1.bf16.msra.mxu0 0
    %406 = vmatprep.subr.bf16.mxu0 0
    %407 = vmatpush1.bf16.msra.mxu0 0
    %408 = vmatprep.subr.bf16.mxu0 0
    %409 = vmatpush1.bf16.msra.mxu0 0
    %410 = vmatprep.subr.bf16.mxu0 0
    %411 = vmatpush1.bf16.msra.mxu0 0
    %412 = vmatprep.subr.bf16.mxu0 0
    %413 = vmatpush1.bf16.msra.mxu0 0
    %414 = vmatprep.subr.bf16.mxu0 0
    %415 = vmatpush1.bf16.msra.mxu0 0
    %416 = vmatprep.subr.bf16.mxu0 0
    %417 = vmatpush1.bf16.msra.mxu0 0
    %418 = vmatprep.subr.bf16.mxu0 0
    %419 = vmatpush1.bf16.msra.mxu0 0
    %420 = vmatprep.subr.bf16.mxu0 0
    %421 = vmatpush1.bf16.msra.mxu0 0
    %422 = vmatprep.mubr.bf16.mxu0 0
    %423 = vmatmul.mubr.bf16.gmra.mrb[0].mxu0 %v388
    %v424 = vpop.f32.mrb[0].mxu0
    %v425 = vadd.f32 %v374, %v424
    %v426 = vpop.f32.mrb[0].mxu0
    %v427 = vpop.f32.mrb[0].mxu0
    %v428 = vadd.f32 %v374, %v427
    %v429 = vpop.f32.mrb[0].mxu0
    %430 = vdwg.mxu0
    %v431 = vmax.f32 %v425, 0.0
    %v432 = vmax.f32 %v428, 0.0
    %v433 = vpack.c.bf16 %v432, %v431
    %v434 = vlaneseq
    %v435 = vshrl.u32 %v434, 7
    %v436 = vsub.s32 0, %v435
    %v437 = vrot.slane %v53, %v436
    %v442 = vunpack.c.l.b16 %v73
    %v443 = vunpack.c.l.b16 %v74
    %v444 = vunpack.c.l.b16 %v75
    %v445 = vunpack.c.l.b16 %v76
    %v446 = vpack.c.b16 %v443, %v442
    %v447 = vpack.c.b16 %v445, %v444
    %v451 = vsel %vm233, %v433, 0
    %453 = vmatprep.subr.bf16.mxu0 0
    %454 = vmatpush1.bf16.msra.mxu0 %v446
    %455 = vmatprep.subr.bf16.mxu0 0
    %456 = vmatpush1.bf16.msra.mxu0 %v447
    %457 = vmatprep.subr.bf16.mxu0 0
    %458 = vmatpush1.bf16.msra.mxu0 0
    %459 = vmatprep.subr.bf16.mxu0 0
    %460 = vmatpush1.bf16.msra.mxu0 0
    %461 = vmatprep.subr.bf16.mxu0 0
    %462 = vmatpush1.bf16.msra.mxu0 0
    %463 = vmatprep.subr.bf16.mxu0 0
    %464 = vmatpush1.bf16.msra.mxu0 0
    %465 = vmatprep.subr.bf16.mxu0 0
    %466 = vmatpush1.bf16.msra.mxu0 0
    %467 = vmatprep.subr.bf16.mxu0 0
    %468 = vmatpush1.bf16.msra.mxu0 0
    %469 = vmatprep.subr.bf16.mxu0 0
    %470 = vmatpush1.bf16.msra.mxu0 0
    %471 = vmatprep.subr.bf16.mxu0 0
    %472 = vmatpush1.bf16.msra.mxu0 0
    %473 = vmatprep.subr.bf16.mxu0 0
    %474 = vmatpush1.bf16.msra.mxu0 0
    %475 = vmatprep.subr.bf16.mxu0 0
    %476 = vmatpush1.bf16.msra.mxu0 0
    %477 = vmatprep.subr.bf16.mxu0 0
    %478 = vmatpush1.bf16.msra.mxu0 0
    %479 = vmatprep.subr.bf16.mxu0 0
    %480 = vmatpush1.bf16.msra.mxu0 0
    %481 = vmatprep.subr.bf16.mxu0 0
    %482 = vmatpush1.bf16.msra.mxu0 0
    %483 = vmatprep.subr.bf16.mxu0 0
    %484 = vmatpush1.bf16.msra.mxu0 0
    %485 = vmatprep.mubr.bf16.mxu0 0
    %486 = vmatmul.mubr.bf16.gmra.mrb[0].mxu0 %v451
    %v487 = vpop.f32.mrb[0].mxu0
    %v488 = vadd.f32 %v437, %v487
    %v489 = vpop.f32.mrb[0].mxu0
    %v490 = vpop.f32.mrb[0].mxu0
    %v491 = vadd.f32 %v437, %v490
    %v492 = vpop.f32.mrb[0].mxu0
    %493 = vdwg.mxu0
    %v494 = vsub.f32 0.0, %v488
    %v495 = vsub.f32 0.0, %v491
    %v496 = vmul.f32 %v494, 1.442695
    %v497 = vpow.pop %v496
    %v498 = vmul.f32 %v495, 1.442695
    %v499 = vpow.pop %v498
    %v500 = vadd.f32 %v497, 1.0
    %v501 = vadd.f32 %v499, 1.0
    %v502 = vrcp.pop %v500
    %v503 = vrcp.pop %v501
    %505 = vrot.lane.b32.xlu0 %v437, 127
    %v506 = vpop.permute.xlu0 %505
    %v508 = vmul.f32 %v502, %v506
    %v509 = vmul.f32 %v503, %v506
    %511 = vset.pattern.permute.xlu0 0
    %512 = vperm.xlu0 %511, %v508
    %v513 = vpop.permute.xlu0 %512
    %516 = vset.pattern.permute.xlu0 0
    %517 = vperm.xlu0 %516, %v509
    %v518 = vpop.permute.xlu0 %517
    %v520 = vmul.f32 %v203, %v513
    %v521 = vmul.f32 %v204, %v518
    %524 = vrot.lane.b32.xlu0 %v520, 16
    %v525 = vpop.permute.xlu0 %524
    %526 = vrot.lane.b32.xlu0 %v521, 16
    %v527 = vpop.permute.xlu0 %526
    %v530 = vsel %vm233, %v364, %v525
    %v531 = vsel %vm233, %v367, %v527
    %v532 = vpack.c.bf16 %v531, %v530
    %533 = vxpose.xlu0.c.b16.start [1/8] %v93, 128
    %534 = vxpose.xlu0.c.b16.cont [2/8] 0, 128
    %535 = vxpose.xlu0.c.b16.cont [3/8] 0, 128
    %536 = vxpose.xlu0.c.b16.cont [4/8] 0, 128
    %537 = vxpose.xlu0.c.b16.cont [5/8] 0, 128
    %538 = vxpose.xlu0.c.b16.cont [6/8] 0, 128
    %539 = vxpose.xlu0.c.b16.cont [7/8] 0, 128
    %540 = vxpose.xlu0.c.b16.end [8/8] 0, 128
    %v541 = vpop.trf.xlu0
    %v542 = vpop.trf.xlu0
    %v543 = vpop.trf.xlu0
    %v544 = vpop.trf.xlu0
    %v545 = vpop.trf.xlu0
    %v546 = vpop.trf.xlu0
    %v547 = vpop.trf.xlu0
    %v548 = vpop.trf.xlu0
    %v550 = vsel %vm230, %v541, 0
    %552 = vmatprep.subr.bf16.mxu0 0
    %553 = vmatpush1.bf16.msra.mxu0 %v532
    %554 = vmatprep.subr.bf16.mxu0 0
    %555 = vmatpush1.bf16.msra.mxu0 0
    %556 = vmatprep.subr.bf16.mxu0 0
    %557 = vmatpush1.bf16.msra.mxu0 0
    %558 = vmatprep.subr.bf16.mxu0 0
    %559 = vmatpush1.bf16.msra.mxu0 0
    %560 = vmatprep.subr.bf16.mxu0 0
    %561 = vmatpush1.bf16.msra.mxu0 0
    %562 = vmatprep.subr.bf16.mxu0 0
    %563 = vmatpush1.bf16.msra.mxu0 0
    %564 = vmatprep.subr.bf16.mxu0 0
    %565 = vmatpush1.bf16.msra.mxu0 0
    %566 = vmatprep.subr.bf16.mxu0 0
    %567 = vmatpush1.bf16.msra.mxu0 0
    %568 = vmatprep.subr.bf16.mxu0 0
    %569 = vmatpush1.bf16.msra.mxu0 0
    %570 = vmatprep.subr.bf16.mxu0 0
    %571 = vmatpush1.bf16.msra.mxu0 0
    %572 = vmatprep.subr.bf16.mxu0 0
    %573 = vmatpush1.bf16.msra.mxu0 0
    %574 = vmatprep.subr.bf16.mxu0 0
    %575 = vmatpush1.bf16.msra.mxu0 0
    %576 = vmatprep.subr.bf16.mxu0 0
    %577 = vmatpush1.bf16.msra.mxu0 0
    %578 = vmatprep.subr.bf16.mxu0 0
    %579 = vmatpush1.bf16.msra.mxu0 0
    %580 = vmatprep.subr.bf16.mxu0 0
    %581 = vmatpush1.bf16.msra.mxu0 0
    %582 = vmatprep.subr.bf16.mxu0 0
    %583 = vmatpush1.bf16.msra.mxu0 0
    %584 = vmatprep.mubr.bf16.mxu0 0
    %585 = vmatmul.mubr.bf16.gmra.mrb[0].mxu0 %v550
    %v586 = vpop.f32.mrb[0].mxu0
    %v587 = vadd.f32 0.0, %v586
    %v588 = vpop.f32.mrb[0].mxu0
    %v589 = vpop.f32.mrb[0].mxu0
    %v590 = vpop.f32.mrb[0].mxu0
    %591 = vdwg.mxu0
    %v592 = vld [vmem:[%s6] sm:$0xf]
    %v593 = vld [vmem:[%s6 + $0x4] sm:$0xf]
    %v594 = vld [vmem:[%s6 + $0x8] sm:$0xf]
    %v595 = vld [vmem:[%s6 + $0xc] sm:$0xf]
    %v596 = vld [vmem:[%s6 + $0x10] sm:$0xf]
    %v597 = vld [vmem:[%s6 + $0x14] sm:$0xf]
    %v598 = vld [vmem:[%s6 + $0x18] sm:$0xf]
    %v599 = vld [vmem:[%s6 + $0x1c] sm:$0xf]
    %v600 = vld [vmem:[%s6 + $0x20] sm:$0xf]
    %v601 = vld [vmem:[%s6 + $0x24] sm:$0xf]
    %v602 = vld [vmem:[%s6 + $0x28] sm:$0xf]
    %v603 = vld [vmem:[%s6 + $0x2c] sm:$0xf]
    %v604 = vld [vmem:[%s6 + $0x30] sm:$0xf]
    %v605 = vld [vmem:[%s6 + $0x34] sm:$0xf]
    %v606 = vld [vmem:[%s6 + $0x38] sm:$0xf]
    %v607 = vld [vmem:[%s6 + $0x3c] sm:$0xf]
    %v608 = vld [vmem:[%s4] sm:$0xff]
    %v609 = vld [vmem:[%s4 + $0x8] sm:$0xff]
    %610 = vset.pattern.permute.xlu0 0
    %611 = vperm.xlu0 %610, %v608
    %v612 = vpop.permute.xlu0 %611
    %613 = vset.pattern.permute.xlu0 0
    %614 = vperm.xlu0 %613, %v609
    %v615 = vpop.permute.xlu0 %614
    %vm616 = vcmp.eq.s32.totalorder %v80, %v612
    %vm617 = vcmp.eq.s32.totalorder %v80, %v615
    %v618 = vsel %vm616, 1, 0
    %v619 = vsel %vm617, 1, 0
    %v620 = vcvt.s32.f32 %v618
    %v621 = vcvt.s32.f32 %v619
    %v622 = vpack.c.bf16 %v621, %v620
    %623 = vset.pattern.permute.xlu0 1
    %624 = vperm.xlu0 %623, %v608
    %v625 = vpop.permute.xlu0 %624
    %626 = vset.pattern.permute.xlu0 1
    %627 = vperm.xlu0 %626, %v609
    %v628 = vpop.permute.xlu0 %627
    %vm629 = vcmp.eq.s32.totalorder %v80, %v625
    %vm630 = vcmp.eq.s32.totalorder %v80, %v628
    %v631 = vsel %vm629, 1, 0
    %v632 = vsel %vm630, 1, 0
    %v633 = vcvt.s32.f32 %v631
    %v634 = vcvt.s32.f32 %v632
    %v635 = vpack.c.bf16 %v634, %v633
    %v637 = vsel %vm107, %v622, 0
    %639 = vmatprep.subr.bf16.mxu0 0
    %640 = vmatpush1.bf16.msra.mxu0 %v113
    %641 = vmatprep.subr.bf16.mxu0 0
    %642 = vmatpush1.bf16.msra.mxu0 0
    %643 = vmatprep.subr.bf16.mxu0 0
    %644 = vmatpush1.bf16.msra.mxu0 0
    %645 = vmatprep.subr.bf16.mxu0 0
    %646 = vmatpush1.bf16.msra.mxu0 0
    %647 = vmatprep.subr.bf16.mxu0 0
    %648 = vmatpush1.bf16.msra.mxu0 0
    %649 = vmatprep.subr.bf16.mxu0 0
    %650 = vmatpush1.bf16.msra.mxu0 0
    %651 = vmatprep.subr.bf16.mxu0 0
    %652 = vmatpush1.bf16.msra.mxu0 0
    %653 = vmatprep.subr.bf16.mxu0 0
    %654 = vmatpush1.bf16.msra.mxu0 0
    %655 = vmatprep.subr.bf16.mxu0 0
    %656 = vmatpush1.bf16.msra.mxu0 0
    %657 = vmatprep.subr.bf16.mxu0 0
    %658 = vmatpush1.bf16.msra.mxu0 0
    %659 = vmatprep.subr.bf16.mxu0 0
    %660 = vmatpush1.bf16.msra.mxu0 0
    %661 = vmatprep.subr.bf16.mxu0 0
    %662 = vmatpush1.bf16.msra.mxu0 0
    %663 = vmatprep.subr.bf16.mxu0 0
    %664 = vmatpush1.bf16.msra.mxu0 0
    %665 = vmatprep.subr.bf16.mxu0 0
    %666 = vmatpush1.bf16.msra.mxu0 0
    %667 = vmatprep.subr.bf16.mxu0 0
    %668 = vmatpush1.bf16.msra.mxu0 0
    %669 = vmatprep.subr.bf16.mxu0 0
    %670 = vmatpush1.bf16.msra.mxu0 0
    %671 = vmatprep.mubr.bf16.mxu0 0
    %672 = vmatmul.mubr.bf16.gmra.mrb[0].mxu0 %v637
    %v673 = vpop.f32.mrb[0].mxu0
    %v674 = vadd.f32 0.0, %v673
    %v675 = vpop.f32.mrb[0].mxu0
    %v676 = vpop.f32.mrb[0].mxu0
    %v677 = vadd.f32 0.0, %v676
    %v678 = vpop.f32.mrb[0].mxu0
    %679 = vdwg.mxu0
    %v681 = vsel %vm107, %v635, 0
    %v684 = vsel %vm111, %v49, 0
    %686 = vmatprep.subr.bf16.mxu0 0
    %687 = vmatpush1.bf16.msra.mxu0 %v684
    %688 = vmatprep.subr.bf16.mxu0 0
    %689 = vmatpush1.bf16.msra.mxu0 0
    %690 = vmatprep.subr.bf16.mxu0 0
    %691 = vmatpush1.bf16.msra.mxu0 0
    %692 = vmatprep.subr.bf16.mxu0 0
    %693 = vmatpush1.bf16.msra.mxu0 0
    %694 = vmatprep.subr.bf16.mxu0 0
    %695 = vmatpush1.bf16.msra.mxu0 0
    %696 = vmatprep.subr.bf16.mxu0 0
    %697 = vmatpush1.bf16.msra.mxu0 0
    %698 = vmatprep.subr.bf16.mxu0 0
    %699 = vmatpush1.bf16.msra.mxu0 0
    %700 = vmatprep.subr.bf16.mxu0 0
    %701 = vmatpush1.bf16.msra.mxu0 0
    %702 = vmatprep.subr.bf16.mxu0 0
    %703 = vmatpush1.bf16.msra.mxu0 0
    %704 = vmatprep.subr.bf16.mxu0 0
    %705 = vmatpush1.bf16.msra.mxu0 0
    %706 = vmatprep.subr.bf16.mxu0 0
    %707 = vmatpush1.bf16.msra.mxu0 0
    %708 = vmatprep.subr.bf16.mxu0 0
    %709 = vmatpush1.bf16.msra.mxu0 0
    %710 = vmatprep.subr.bf16.mxu0 0
    %711 = vmatpush1.bf16.msra.mxu0 0
    %712 = vmatprep.subr.bf16.mxu0 0
    %713 = vmatpush1.bf16.msra.mxu0 0
    %714 = vmatprep.subr.bf16.mxu0 0
    %715 = vmatpush1.bf16.msra.mxu0 0
    %716 = vmatprep.subr.bf16.mxu0 0
    %717 = vmatpush1.bf16.msra.mxu0 0
    %718 = vmatprep.mubr.bf16.mxu0 0
    %719 = vmatmul.mubr.bf16.gmra.mrb[0].mxu0 %v681
    %v720 = vpop.f32.mrb[0].mxu0
    %v721 = vadd.f32 0.0, %v720
    %v722 = vpop.f32.mrb[0].mxu0
    %v723 = vpop.f32.mrb[0].mxu0
    %v724 = vadd.f32 0.0, %v723
    %v725 = vpop.f32.mrb[0].mxu0
    %726 = vdwg.mxu0
    %729 = vrot.lane.b32.xlu0 %v721, 8
    %v730 = vpop.permute.xlu0 %729
    %731 = vrot.lane.b32.xlu0 %v724, 8
    %v732 = vpop.permute.xlu0 %731
    %v735 = vsub.f32 %v674, %v730
    %v736 = vsub.f32 %v677, %v732
    %v737 = vmul.f32 %v735, %v735
    %v738 = vmul.f32 %v736, %v736
    %741 = vrot.lane.b32.xlu0 %v737, 112
    %v742 = vpop.permute.xlu0 %741
    %743 = vrot.lane.b32.xlu0 %v738, 112
    %v744 = vpop.permute.xlu0 %743
    %v747 = vsel %vm215, %v742, 0.0
    %748 = vadd.xlane.f32.xlu0 %v747
    %v749 = vpop.xlane.xlu0 %748
    %v750 = vsel %vm215, %v744, 0.0
    %751 = vadd.xlane.f32.xlu0 %v750
    %v752 = vpop.xlane.xlu0 %751
    %753 = vrot.lane.b32.xlu0 %v721, 16
    %v754 = vpop.permute.xlu0 %753
    %755 = vrot.lane.b32.xlu0 %v724, 16
    %v756 = vpop.permute.xlu0 %755
    %v759 = vsel %vm230, %v674, %v754
    %v760 = vsel %vm230, %v677, %v756
    %vm761 = vcmask 195584
    %v762 = vsel %vm761, %v759, %v749
    %v763 = vsel %vm761, %v760, %v752
    %v764 = vpack.c.bf16 %v763, %v762
    %v765 = vlaneseq
    %v766 = vshrl.u32 %v765, 7
    %v767 = vsub.s32 0, %v766
    %v768 = vrot.slane %v54, %v767
    %v773 = vunpack.c.l.b16 %v592
    %v774 = vunpack.c.l.b16 %v593
    %v775 = vunpack.c.l.b16 %v594
    %v776 = vunpack.c.l.b16 %v595
    %v777 = vpack.c.b16 %v774, %v773
    %v778 = vpack.c.b16 %v776, %v775
    %vm780 = vcmask 203776
    %v782 = vsel %vm780, %v764, 0
    %vm784 = vcmask 1044480
    %v785 = vsel %vm111, 4294967295, 65535
    %v786 = vsel %vm784, %v785, 0
    %v788 = vand.u32 %v778, %v786
    %790 = vmatprep.subr.bf16.mxu0 0
    %791 = vmatpush1.bf16.msra.mxu0 %v777
    %792 = vmatprep.subr.bf16.mxu0 0
    %793 = vmatpush1.bf16.msra.mxu0 %v788
    %794 = vmatprep.subr.bf16.mxu0 0
    %795 = vmatpush1.bf16.msra.mxu0 0
    %796 = vmatprep.subr.bf16.mxu0 0
    %797 = vmatpush1.bf16.msra.mxu0 0
    %798 = vmatprep.subr.bf16.mxu0 0
    %799 = vmatpush1.bf16.msra.mxu0 0
    %800 = vmatprep.subr.bf16.mxu0 0
    %801 = vmatpush1.bf16.msra.mxu0 0
    %802 = vmatprep.subr.bf16.mxu0 0
    %803 = vmatpush1.bf16.msra.mxu0 0
    %804 = vmatprep.subr.bf16.mxu0 0
    %805 = vmatpush1.bf16.msra.mxu0 0
    %806 = vmatprep.subr.bf16.mxu0 0
    %807 = vmatpush1.bf16.msra.mxu0 0
    %808 = vmatprep.subr.bf16.mxu0 0
    %809 = vmatpush1.bf16.msra.mxu0 0
    %810 = vmatprep.subr.bf16.mxu0 0
    %811 = vmatpush1.bf16.msra.mxu0 0
    %812 = vmatprep.subr.bf16.mxu0 0
    %813 = vmatpush1.bf16.msra.mxu0 0
    %814 = vmatprep.subr.bf16.mxu0 0
    %815 = vmatpush1.bf16.msra.mxu0 0
    %816 = vmatprep.subr.bf16.mxu0 0
    %817 = vmatpush1.bf16.msra.mxu0 0
    %818 = vmatprep.subr.bf16.mxu0 0
    %819 = vmatpush1.bf16.msra.mxu0 0
    %820 = vmatprep.subr.bf16.mxu0 0
    %821 = vmatpush1.bf16.msra.mxu0 0
    %822 = vmatprep.mubr.bf16.mxu0 0
    %823 = vmatmul.mubr.bf16.gmra.mrb[0].mxu0 %v782
    %v824 = vpop.f32.mrb[0].mxu0
    %v825 = vadd.f32 %v768, %v824
    %v826 = vpop.f32.mrb[0].mxu0
    %v827 = vpop.f32.mrb[0].mxu0
    %v828 = vadd.f32 %v768, %v827
    %v829 = vpop.f32.mrb[0].mxu0
    %830 = vdwg.mxu0
    %v831 = vmax.f32 %v825, 0.0
    %v832 = vmax.f32 %v828, 0.0
    %v833 = vpack.c.bf16 %v832, %v831
    %v834 = vlaneseq
    %v835 = vshrl.u32 %v834, 7
    %v836 = vsub.s32 0, %v835
    %v837 = vrot.slane %v55, %v836
    %v842 = vunpack.c.l.b16 %v596
    %v843 = vunpack.c.l.b16 %v597
    %v844 = vunpack.c.l.b16 %v598
    %v845 = vunpack.c.l.b16 %v599
    %v846 = vpack.c.b16 %v843, %v842
    %v847 = vpack.c.b16 %v845, %v844
    %v851 = vsel %vm233, %v833, 0
    %853 = vmatprep.subr.bf16.mxu0 0
    %854 = vmatpush1.bf16.msra.mxu0 %v846
    %855 = vmatprep.subr.bf16.mxu0 0
    %856 = vmatpush1.bf16.msra.mxu0 %v847
    %857 = vmatprep.subr.bf16.mxu0 0
    %858 = vmatpush1.bf16.msra.mxu0 0
    %859 = vmatprep.subr.bf16.mxu0 0
    %860 = vmatpush1.bf16.msra.mxu0 0
    %861 = vmatprep.subr.bf16.mxu0 0
    %862 = vmatpush1.bf16.msra.mxu0 0
    %863 = vmatprep.subr.bf16.mxu0 0
    %864 = vmatpush1.bf16.msra.mxu0 0
    %865 = vmatprep.subr.bf16.mxu0 0
    %866 = vmatpush1.bf16.msra.mxu0 0
    %867 = vmatprep.subr.bf16.mxu0 0
    %868 = vmatpush1.bf16.msra.mxu0 0
    %869 = vmatprep.subr.bf16.mxu0 0
    %870 = vmatpush1.bf16.msra.mxu0 0
    %871 = vmatprep.subr.bf16.mxu0 0
    %872 = vmatpush1.bf16.msra.mxu0 0
    %873 = vmatprep.subr.bf16.mxu0 0
    %874 = vmatpush1.bf16.msra.mxu0 0
    %875 = vmatprep.subr.bf16.mxu0 0
    %876 = vmatpush1.bf16.msra.mxu0 0
    %877 = vmatprep.subr.bf16.mxu0 0
    %878 = vmatpush1.bf16.msra.mxu0 0
    %879 = vmatprep.subr.bf16.mxu0 0
    %880 = vmatpush1.bf16.msra.mxu0 0
    %881 = vmatprep.subr.bf16.mxu0 0
    %882 = vmatpush1.bf16.msra.mxu0 0
    %883 = vmatprep.subr.bf16.mxu0 0
    %884 = vmatpush1.bf16.msra.mxu0 0
    %885 = vmatprep.mubr.bf16.mxu0 0
    %886 = vmatmul.mubr.bf16.gmra.mrb[0].mxu0 %v851
    %v887 = vpop.f32.mrb[0].mxu0
    %v888 = vadd.f32 %v837, %v887
    %v889 = vpop.f32.mrb[0].mxu0
    %v890 = vpop.f32.mrb[0].mxu0
    %v891 = vadd.f32 %v837, %v890
    %v892 = vpop.f32.mrb[0].mxu0
    %893 = vdwg.mxu0
    %v894 = vpack.c.bf16 %v891, %v888
    %v895 = vlaneseq
    %v896 = vshrl.u32 %v895, 7
    %v897 = vsub.s32 0, %v896
    %v898 = vrot.slane %v56, %v897
    %v903 = vunpack.c.l.b16 %v600
    %v904 = vunpack.c.l.b16 %v601
    %v905 = vunpack.c.l.b16 %v602
    %v906 = vunpack.c.l.b16 %v603
    %v907 = vpack.c.b16 %v904, %v903
    %v908 = vpack.c.b16 %v906, %v905
    %v912 = vsel %vm233, %v894, 0
    %914 = vmatprep.subr.bf16.mxu0 0
    %915 = vmatpush1.bf16.msra.mxu0 %v907
    %916 = vmatprep.subr.bf16.mxu0 0
    %917 = vmatpush1.bf16.msra.mxu0 %v908
    %918 = vmatprep.subr.bf16.mxu0 0
    %919 = vmatpush1.bf16.msra.mxu0 0
    %920 = vmatprep.subr.bf16.mxu0 0
    %921 = vmatpush1.bf16.msra.mxu0 0
    %922 = vmatprep.subr.bf16.mxu0 0
    %923 = vmatpush1.bf16.msra.mxu0 0
    %924 = vmatprep.subr.bf16.mxu0 0
    %925 = vmatpush1.bf16.msra.mxu0 0
    %926 = vmatprep.subr.bf16.mxu0 0
    %927 = vmatpush1.bf16.msra.mxu0 0
    %928 = vmatprep.subr.bf16.mxu0 0
    %929 = vmatpush1.bf16.msra.mxu0 0
    %930 = vmatprep.subr.bf16.mxu0 0
    %931 = vmatpush1.bf16.msra.mxu0 0
    %932 = vmatprep.subr.bf16.mxu0 0
    %933 = vmatpush1.bf16.msra.mxu0 0
    %934 = vmatprep.subr.bf16.mxu0 0
    %935 = vmatpush1.bf16.msra.mxu0 0
    %936 = vmatprep.subr.bf16.mxu0 0
    %937 = vmatpush1.bf16.msra.mxu0 0
    %938 = vmatprep.subr.bf16.mxu0 0
    %939 = vmatpush1.bf16.msra.mxu0 0
    %940 = vmatprep.subr.bf16.mxu0 0
    %941 = vmatpush1.bf16.msra.mxu0 0
    %942 = vmatprep.subr.bf16.mxu0 0
    %943 = vmatpush1.bf16.msra.mxu0 0
    %944 = vmatprep.subr.bf16.mxu0 0
    %945 = vmatpush1.bf16.msra.mxu0 0
    %946 = vmatprep.mubr.bf16.mxu0 0
    %947 = vmatmul.mubr.bf16.gmra.mrb[0].mxu0 %v912
    %v948 = vpop.f32.mrb[0].mxu0
    %v949 = vadd.f32 %v898, %v948
    %v950 = vpop.f32.mrb[0].mxu0
    %v951 = vpop.f32.mrb[0].mxu0
    %v952 = vadd.f32 %v898, %v951
    %v953 = vpop.f32.mrb[0].mxu0
    %954 = vdwg.mxu0
    %v955 = vmax.f32 %v949, 0.0
    %v956 = vmax.f32 %v952, 0.0
    %v957 = vpack.c.bf16 %v956, %v955
    %v958 = vlaneseq
    %v959 = vshrl.u32 %v958, 7
    %v960 = vsub.s32 0, %v959
    %v961 = vrot.slane %v57, %v960
    %v966 = vunpack.c.l.b16 %v604
    %v967 = vunpack.c.l.b16 %v605
    %v968 = vunpack.c.l.b16 %v606
    %v969 = vunpack.c.l.b16 %v607
    %v970 = vpack.c.b16 %v967, %v966
    %v971 = vpack.c.b16 %v969, %v968
    %v975 = vsel %vm233, %v957, 0
    %977 = vmatprep.subr.bf16.mxu0 0
    %978 = vmatpush1.bf16.msra.mxu0 %v970
    %979 = vmatprep.subr.bf16.mxu0 0
    %980 = vmatpush1.bf16.msra.mxu0 %v971
    %981 = vmatprep.subr.bf16.mxu0 0
    %982 = vmatpush1.bf16.msra.mxu0 0
    %983 = vmatprep.subr.bf16.mxu0 0
    %984 = vmatpush1.bf16.msra.mxu0 0
    %985 = vmatprep.subr.bf16.mxu0 0
    %986 = vmatpush1.bf16.msra.mxu0 0
    %987 = vmatprep.subr.bf16.mxu0 0
    %988 = vmatpush1.bf16.msra.mxu0 0
    %989 = vmatprep.subr.bf16.mxu0 0
    %990 = vmatpush1.bf16.msra.mxu0 0
    %991 = vmatprep.subr.bf16.mxu0 0
    %992 = vmatpush1.bf16.msra.mxu0 0
    %993 = vmatprep.subr.bf16.mxu0 0
    %994 = vmatpush1.bf16.msra.mxu0 0
    %995 = vmatprep.subr.bf16.mxu0 0
    %996 = vmatpush1.bf16.msra.mxu0 0
    %997 = vmatprep.subr.bf16.mxu0 0
    %998 = vmatpush1.bf16.msra.mxu0 0
    %999 = vmatprep.subr.bf16.mxu0 0
    %1000 = vmatpush1.bf16.msra.mxu0 0
    %1001 = vmatprep.subr.bf16.mxu0 0
    %1002 = vmatpush1.bf16.msra.mxu0 0
    %1003 = vmatprep.subr.bf16.mxu0 0
    %1004 = vmatpush1.bf16.msra.mxu0 0
    %1005 = vmatprep.subr.bf16.mxu0 0
    %1006 = vmatpush1.bf16.msra.mxu0 0
    %1007 = vmatprep.subr.bf16.mxu0 0
    %1008 = vmatpush1.bf16.msra.mxu0 0
    %1009 = vmatprep.mubr.bf16.mxu0 0
    %1010 = vmatmul.mubr.bf16.gmra.mrb[0].mxu0 %v975
    %v1011 = vpop.f32.mrb[0].mxu0
    %v1012 = vadd.f32 %v961, %v1011
    %v1013 = vpop.f32.mrb[0].mxu0
    %v1014 = vpop.f32.mrb[0].mxu0
    %v1015 = vadd.f32 %v961, %v1014
    %v1016 = vpop.f32.mrb[0].mxu0
    %1017 = vdwg.mxu0
    %v1018 = vsub.f32 0.0, %v1012
    %v1019 = vsub.f32 0.0, %v1015
    %v1020 = vmul.f32 %v1018, 1.442695
    %v1021 = vpow.pop %v1020
    %v1022 = vmul.f32 %v1019, 1.442695
    %v1023 = vpow.pop %v1022
    %v1024 = vadd.f32 %v1021, 1.0
    %v1025 = vadd.f32 %v1023, 1.0
    %v1026 = vrcp.pop %v1024
    %v1027 = vrcp.pop %v1025
    %1029 = vrot.lane.b32.xlu0 %v961, 127
    %v1030 = vpop.permute.xlu0 %1029
    %v1032 = vmul.f32 %v1026, %v1030
    %v1033 = vmul.f32 %v1027, %v1030
    %1035 = vset.pattern.permute.xlu0 0
    %1036 = vperm.xlu0 %1035, %v1032
    %v1037 = vpop.permute.xlu0 %1036
    %1040 = vset.pattern.permute.xlu0 0
    %1041 = vperm.xlu0 %1040, %v1033
    %v1042 = vpop.permute.xlu0 %1041
    %v1044 = vmul.f32 %v735, %v1037
    %v1045 = vmul.f32 %v736, %v1042
    %1048 = vrot.lane.b32.xlu0 %v1044, 16
    %v1049 = vpop.permute.xlu0 %1048
    %1050 = vrot.lane.b32.xlu0 %v1045, 16
    %v1051 = vpop.permute.xlu0 %1050
    %v1054 = vsel %vm233, %v888, %v1049
    %v1055 = vsel %vm233, %v891, %v1051
    %v1056 = vpack.c.bf16 %v1055, %v1054
    %1057 = vxpose.xlu0.c.b16.start [1/8] %v622, 128
    %1058 = vxpose.xlu0.c.b16.cont [2/8] 0, 128
    %1059 = vxpose.xlu0.c.b16.cont [3/8] 0, 128
    %1060 = vxpose.xlu0.c.b16.cont [4/8] 0, 128
    %1061 = vxpose.xlu0.c.b16.cont [5/8] 0, 128
    %1062 = vxpose.xlu0.c.b16.cont [6/8] 0, 128
    %1063 = vxpose.xlu0.c.b16.cont [7/8] 0, 128
    %1064 = vxpose.xlu0.c.b16.end [8/8] 0, 128
    %v1065 = vpop.trf.xlu0
    %v1066 = vpop.trf.xlu0
    %v1067 = vpop.trf.xlu0
    %v1068 = vpop.trf.xlu0
    %v1069 = vpop.trf.xlu0
    %v1070 = vpop.trf.xlu0
    %v1071 = vpop.trf.xlu0
    %v1072 = vpop.trf.xlu0
    %v1074 = vsel %vm230, %v1065, 0
    %1076 = vmatprep.subr.bf16.mxu0 0
    %1077 = vmatpush1.bf16.msra.mxu0 %v1056
    %1078 = vmatprep.subr.bf16.mxu0 0
    %1079 = vmatpush1.bf16.msra.mxu0 0
    %1080 = vmatprep.subr.bf16.mxu0 0
    %1081 = vmatpush1.bf16.msra.mxu0 0
    %1082 = vmatprep.subr.bf16.mxu0 0
    %1083 = vmatpush1.bf16.msra.mxu0 0
    %1084 = vmatprep.subr.bf16.mxu0 0
    %1085 = vmatpush1.bf16.msra.mxu0 0
    %1086 = vmatprep.subr.bf16.mxu0 0
    %1087 = vmatpush1.bf16.msra.mxu0 0
    %1088 = vmatprep.subr.bf16.mxu0 0
    %1089 = vmatpush1.bf16.msra.mxu0 0
    %1090 = vmatprep.subr.bf16.mxu0 0
    %1091 = vmatpush1.bf16.msra.mxu0 0
    %1092 = vmatprep.subr.bf16.mxu0 0
    %1093 = vmatpush1.bf16.msra.mxu0 0
    %1094 = vmatprep.subr.bf16.mxu0 0
    %1095 = vmatpush1.bf16.msra.mxu0 0
    %1096 = vmatprep.subr.bf16.mxu0 0
    %1097 = vmatpush1.bf16.msra.mxu0 0
    %1098 = vmatprep.subr.bf16.mxu0 0
    %1099 = vmatpush1.bf16.msra.mxu0 0
    %1100 = vmatprep.subr.bf16.mxu0 0
    %1101 = vmatpush1.bf16.msra.mxu0 0
    %1102 = vmatprep.subr.bf16.mxu0 0
    %1103 = vmatpush1.bf16.msra.mxu0 0
    %1104 = vmatprep.subr.bf16.mxu0 0
    %1105 = vmatpush1.bf16.msra.mxu0 0
    %1106 = vmatprep.subr.bf16.mxu0 0
    %1107 = vmatpush1.bf16.msra.mxu0 0
    %1108 = vmatprep.mubr.bf16.mxu0 0
    %1109 = vmatmul.mubr.bf16.gmra.mrb[0].mxu0 %v1074
    %v1110 = vpop.f32.mrb[0].mxu0
    %v1111 = vadd.f32 0.0, %v1110
    %v1112 = vpop.f32.mrb[0].mxu0
    %v1113 = vpop.f32.mrb[0].mxu0
    %v1114 = vpop.f32.mrb[0].mxu0
    %1115 = vdwg.mxu0
    %v1116 = vld [vmem:[#allocation2] sm:$0xf]
    %v1117 = vld [vmem:[#allocation2 + $0x4] sm:$0xf]
    %v1118 = vld [vmem:[#allocation2 + $0x8] sm:$0xf]
    %v1119 = vld [vmem:[#allocation2 + $0xc] sm:$0xf]
    %v1120 = vld [vmem:[#allocation2 + $0x10] sm:$0xf]
    %v1121 = vld [vmem:[#allocation2 + $0x14] sm:$0xf]
    %v1122 = vld [vmem:[#allocation2 + $0x18] sm:$0xf]
    %v1123 = vld [vmem:[#allocation2 + $0x1c] sm:$0xf]
    %v1124 = vld [vmem:[#allocation2 + $0x20] sm:$0xf]
    %v1125 = vld [vmem:[#allocation2 + $0x24] sm:$0xf]
    %v1126 = vld [vmem:[#allocation2 + $0x28] sm:$0xf]
    %v1127 = vld [vmem:[#allocation2 + $0x2c] sm:$0xf]
    %v1128 = vld [vmem:[#allocation2 + $0x30] sm:$0xf]
    %v1129 = vld [vmem:[#allocation2 + $0x34] sm:$0xf]
    %v1130 = vpack.c.bf16 %v587, %v587
    %v1131 = vpack.c.bf16 %v1111, %v1111
    %1133 = vrot.lane.b32.xlu0 %v1130, 16
    %v1134 = vpop.permute.xlu0 %1133
    %1136 = vrot.lane.b32.xlu0 %v1131, 48
    %v1137 = vpop.permute.xlu0 %1136
    %v1139 = vsel %vm230, %v47, %v1134
    %vm1140 = vcmask 392192
    %v1142 = vsel %vm1140, %v1139, %v1137
    %v1143 = vlaneseq
    %v1144 = vshrl.u32 %v1143, 7
    %v1145 = vsub.s32 0, %v1144
    %v1146 = vrot.slane %v58, %v1145
    %v1157 = vunpack.c.l.b16 %v1116
    %v1158 = vunpack.c.l.b16 %v1117
    %v1159 = vunpack.c.l.b16 %v1118
    %v1160 = vunpack.c.l.b16 %v1119
    %v1161 = vunpack.c.l.b16 %v1120
    %v1162 = vunpack.c.l.b16 %v1121
    %v1163 = vunpack.c.l.b16 %v1122
    %v1164 = vunpack.c.l.b16 %v1123
    %v1165 = vunpack.c.l.b16 %v1124
    %v1166 = vunpack.c.l.b16 %v1125
    %v1167 = vpack.c.b16 %v1158, %v1157
    %v1168 = vpack.c.b16 %v1160, %v1159
    %v1169 = vpack.c.b16 %v1162, %v1161
    %v1170 = vpack.c.b16 %v1164, %v1163
    %v1171 = vpack.c.b16 %v1166, %v1165
    %vm1177 = vcmask 654336
    %v1178 = vsel %vm1177, %v1142, 0
    %1180 = vmatprep.subr.bf16.mxu0 0
    %1181 = vmatpush1.bf16.msra.mxu0 %v1167
    %1182 = vmatprep.subr.bf16.mxu0 0
    %1183 = vmatpush1.bf16.msra.mxu0 %v1168
    %1184 = vmatprep.subr.bf16.mxu0 0
    %1185 = vmatpush1.bf16.msra.mxu0 %v1169
    %1186 = vmatprep.subr.bf16.mxu0 0
    %1187 = vmatpush1.bf16.msra.mxu0 %v1170
    %1188 = vmatprep.subr.bf16.mxu0 0
    %1189 = vmatpush1.bf16.msra.mxu0 %v1171
    %1190 = vmatprep.subr.bf16.mxu0 0
    %1191 = vmatpush1.bf16.msra.mxu0 0
    %1192 = vmatprep.subr.bf16.mxu0 0
    %1193 = vmatpush1.bf16.msra.mxu0 0
    %1194 = vmatprep.subr.bf16.mxu0 0
    %1195 = vmatpush1.bf16.msra.mxu0 0
    %1196 = vmatprep.subr.bf16.mxu0 0
    %1197 = vmatpush1.bf16.msra.mxu0 0
    %1198 = vmatprep.subr.bf16.mxu0 0
    %1199 = vmatpush1.bf16.msra.mxu0 0
    %1200 = vmatprep.subr.bf16.mxu0 0
    %1201 = vmatpush1.bf16.msra.mxu0 0
    %1202 = vmatprep.subr.bf16.mxu0 0
    %1203 = vmatpush1.bf16.msra.mxu0 0
    %1204 = vmatprep.subr.bf16.mxu0 0
    %1205 = vmatpush1.bf16.msra.mxu0 0
    %1206 = vmatprep.subr.bf16.mxu0 0
    %1207 = vmatpush1.bf16.msra.mxu0 0
    %1208 = vmatprep.subr.bf16.mxu0 0
    %1209 = vmatpush1.bf16.msra.mxu0 0
    %1210 = vmatprep.subr.bf16.mxu0 0
    %1211 = vmatpush1.bf16.msra.mxu0 0
    %1212 = vmatprep.mubr.bf16.mxu0 0
    %1213 = vmatmul.mubr.bf16.gmra.mrb[0].mxu0 %v1178
    %v1214 = vpop.f32.mrb[0].mxu0
    %v1215 = vadd.f32 %v1146, %v1214
    %v1216 = vpop.f32.mrb[0].mxu0
    %v1217 = vpop.f32.mrb[0].mxu0
    %v1218 = vpop.f32.mrb[0].mxu0
    %1219 = vdwg.mxu0
    %v1220 = vmax.f32 %v1215, 0.0
    %v1221 = vpack.c.bf16 %v1220, %v1220
    %v1222 = vlaneseq
    %v1223 = vshrl.u32 %v1222, 7
    %v1224 = vsub.s32 0, %v1223
    %v1225 = vrot.slane %v59, %v1224
    %v1230 = vunpack.c.l.b16 %v1126
    %v1231 = vunpack.c.l.b16 %v1127
    %v1232 = vunpack.c.l.b16 %v1128
    %v1233 = vunpack.c.l.b16 %v1129
    %v1234 = vpack.c.b16 %v1231, %v1230
    %v1235 = vpack.c.b16 %v1233, %v1232
    %v1239 = vsel %vm233, %v1221, 0
    %1241 = vmatprep.subr.bf16.mxu0 0
    %1242 = vmatpush1.bf16.msra.mxu0 %v1234
    %1243 = vmatprep.subr.bf16.mxu0 0
    %1244 = vmatpush1.bf16.msra.mxu0 %v1235
    %1245 = vmatprep.subr.bf16.mxu0 0
    %1246 = vmatpush1.bf16.msra.mxu0 0
    %1247 = vmatprep.subr.bf16.mxu0 0
    %1248 = vmatpush1.bf16.msra.mxu0 0
    %1249 = vmatprep.subr.bf16.mxu0 0
    %1250 = vmatpush1.bf16.msra.mxu0 0
    %1251 = vmatprep.subr.bf16.mxu0 0
    %1252 = vmatpush1.bf16.msra.mxu0 0
    %1253 = vmatprep.subr.bf16.mxu0 0
    %1254 = vmatpush1.bf16.msra.mxu0 0
    %1255 = vmatprep.subr.bf16.mxu0 0
    %1256 = vmatpush1.bf16.msra.mxu0 0
    %1257 = vmatprep.subr.bf16.mxu0 0
    %1258 = vmatpush1.bf16.msra.mxu0 0
    %1259 = vmatprep.subr.bf16.mxu0 0
    %1260 = vmatpush1.bf16.msra.mxu0 0
    %1261 = vmatprep.subr.bf16.mxu0 0
    %1262 = vmatpush1.bf16.msra.mxu0 0
    %1263 = vmatprep.subr.bf16.mxu0 0
    %1264 = vmatpush1.bf16.msra.mxu0 0
    %1265 = vmatprep.subr.bf16.mxu0 0
    %1266 = vmatpush1.bf16.msra.mxu0 0
    %1267 = vmatprep.subr.bf16.mxu0 0
    %1268 = vmatpush1.bf16.msra.mxu0 0
    %1269 = vmatprep.subr.bf16.mxu0 0
    %1270 = vmatpush1.bf16.msra.mxu0 0
    %1271 = vmatprep.subr.bf16.mxu0 0
    %1272 = vmatpush1.bf16.msra.mxu0 0
    %1273 = vmatprep.mubr.bf16.mxu0 0
    %1274 = vmatmul.mubr.bf16.gmra.mrb[0].mxu0 %v1239
    %v1275 = vpop.f32.mrb[0].mxu0
    %v1276 = vadd.f32 %v1225, %v1275
    %v1277 = vpop.f32.mrb[0].mxu0
    %v1278 = vpop.f32.mrb[0].mxu0
    %v1279 = vpop.f32.mrb[0].mxu0
    %1280 = vdwg.mxu0
    %v1281 = vunpack.c.l.bf16 %v47
    %1283 = vrot.lane.b32.xlu0 %v587, 112
    %v1284 = vpop.permute.xlu0 %1283
    %v1286 = vadd.f32 %v1281, %v1284
    %1288 = vrot.lane.b32.xlu0 %v1111, 112
    %v1289 = vpop.permute.xlu0 %1288
    %v1291 = vadd.f32 %v1286, %v1289
    %v1292 = vsel %vm230, %v1276, %v1291
    %vm1293 = vcmask 154624
    %v1294 = vsel %vm1293, %v1292, 0.0
    %1295 = vst [vmem:[%s9] sm:$0xff] %v1294
    // Predicated region
    $region42: #{forward.1} parent=1 // pred_check
      _
    $region43: #{forward.1} parent=1 // pred_check_branch
      %1297 = sbr.rel (0) target = $region45
    $region44: #{forward.1} parent=1 // pred_region
      _
    $region45: #{forward.1} parent=1 // pred_fallthru
      _
    // Predicated region
    $region46: #{forward.1} parent=1 // pred_check
      _
    $region47: #{forward.1} parent=1 // pred_check_branch
      %1299 = sbr.rel (0) target = $region49
    $region48: #{forward.1} parent=1 // pred_region
      _
    $region49: #{forward.1} parent=1 // pred_fallthru
      _
    %1300 = vsyncpa [#allocation3], 1

</llo_original>
